<compile_context>
chip_gen: v7x
topology: tpu7x:2x2x1
jax: 0.10.0
libtpu: 0.0.40
codegen_flags: <defaults>
</compile_context>

<pallas_src>
import numpy as np
import jax
import jax.numpy as jnp
from jax.experimental import pallas as pl
from jax.experimental.pallas import tpu as pltpu

H_DIM = 5
INPUT_SIZE = 2
RESAMP_ALPHA = 0.1

# Normalization constants hard-coded in the PyTorch forward.  They are folded
# into the packed weights below and never appear inside the kernel.
# NOTE: the reference divides by the *variance* vector (not sqrt(var)); the
# fold reproduces that exactly.
_TRANS_MEAN = np.array(
    [0.00497861683, 0.154884455, 0.12494035, 0.750835131,
     0.0199980894, 7.63748711e-05, -2.50800646e-05], dtype=np.float32)
_TRANS_VAR = np.array(
    [0.0028861, 0.07228504, 0.07229742, 0.1444811,
     0.01155304, 0.02310782, 0.02304983], dtype=np.float32)
_VOL_VAR = 0.00291117
_VOL_MEAN = 0.00552819


def _sigmoid(x):
    # sigmoid(x) == 0.5 * (tanh(x/2) + 1); tanh goes to the EUP, scalars stay
    # literals (no captured array constants).
    return 0.5 * (jnp.tanh(0.5 * x) + 1.0)


def _pfrnn_kernel(x8_ref, w200_ref, w100_ref, aux_ref, out_ref):
    # x8  : (tile, 8) f32  = [h0(0:5) | input_(5:7) | p0(7)]
    # w200: (432, 200) bf16: rows 0:7 = fc_trans_l1 (norm folded, h0+input_),
    #       rows 16:216 = l2, rows 224:424 = l3 (16-aligned starts for bf16).
    # w100: (320, 100) bf16: rows 0:200 = fc_trans_l4, rows 208:308 = fc_obs_l2.
    # aux : (16, 256) f32: rows 0..7 biases, row 8 = fc_trans_l5 w * VOL_VAR,
    #       row 9 = fc_obs_l3 w, rows 10/11 = fc_obs_l1 w for [vol, input_last].
    x8 = x8_ref[...]                         # (tile, 8) f32
    aux = aux_ref[...]                       # (16, 256) f32
    xb = x8.astype(jnp.bfloat16)

    # fc_trans: 4 MXU passes (bf16 in, f32 acc) + tanh chain in f32.
    h = jnp.tanh(jnp.dot(xb, w200_ref[0:8, :],
                         preferred_element_type=jnp.float32) + aux[0:1, 0:200])
    h = jnp.tanh(jnp.dot(h.astype(jnp.bfloat16), w200_ref[16:216, :],
                         preferred_element_type=jnp.float32) + aux[1:2, 0:200])
    h = jnp.tanh(jnp.dot(h.astype(jnp.bfloat16), w200_ref[224:424, :],
                         preferred_element_type=jnp.float32) + aux[2:3, 0:200])
    h = jnp.tanh(jnp.dot(h.astype(jnp.bfloat16), w100_ref[0:200, :],
                         preferred_element_type=jnp.float32) + aux[3:4, 0:100])
    # fc_trans layer 5 (100 -> 1) as an f32 lane reduce; vol affine folded in.
    vol = jnp.sum(h * aux[8:9, 0:100], axis=-1, keepdims=True) + aux[4:5, 0:1]

    # fc_obs on [h1[:, -1:], input_[:, -1:]] == [vol, input_last]:
    # layer 1 = two rank-1 broadcasts, layer 3 = lane reduce (f32 throughout
    # except the 100x100 MXU pass).
    o = _sigmoid(vol * aux[10:11, 0:100]
                 + x8[:, 6:7] * aux[11:12, 0:100]
                 + aux[5:6, 0:100])
    o = _sigmoid(jnp.dot(o.astype(jnp.bfloat16), w100_ref[208:308, :],
                         preferred_element_type=jnp.float32) + aux[6:7, 0:100])
    obs = _sigmoid(jnp.sum(o * aux[9:10, 0:100], axis=-1, keepdims=True)
                   + aux[7:8, 0:1])                       # (tile, 1)

    # Unnormalized particle weight p1 = obs_likelihood * p0.
    p1u = obs * x8[:, 7:8]

    # Assemble the output row in registers and issue ONE store:
    # cols 0:4 = h0[:, :4] carry, col 4 = vol, cols 5.. = p1u (5 is the real
    # one; 6,7 are pad the wrapper ignores).
    col = jax.lax.broadcasted_iota(jnp.int32, x8.shape, 1)
    vol_b = jnp.broadcast_to(vol, x8.shape)
    p1_b = jnp.broadcast_to(p1u, x8.shape)
    out_ref[...] = jnp.where(col < 4, x8, jnp.where(col == 4, vol_b, p1_b))


def _pfrnn_pallas(x8, packed, *, tile_n=256):
    N = x8.shape[0]
    w200, w100, aux = packed
    if N <= tile_n or N % tile_n != 0:
        tile_n = N                      # small N: single block, no pipeline overhead
    grid = (N // tile_n,)
    in_specs = [
        pl.BlockSpec((tile_n, 8), lambda i: (i, 0)),
        pl.BlockSpec(w200.shape, lambda i: (0, 0)),   # weights resident across rows
        pl.BlockSpec(w100.shape, lambda i: (0, 0)),
        pl.BlockSpec(aux.shape, lambda i: (0, 0)),
    ]
    out_specs = pl.BlockSpec((tile_n, 8), lambda i: (i, 0))
    return pl.pallas_call(
        _pfrnn_kernel,
        grid=grid,
        in_specs=in_specs,
        out_specs=out_specs,
        out_shape=jax.ShapeDtypeStruct((N, 8), jnp.float32),
        compiler_params=pltpu.CompilerParams(
            dimension_semantics=("parallel",)),
    )(x8, w200, w100, aux)


def garch_pfrnn_forward(packed_params, input_, hx, key, num_particles):
    """One PF-RNN step.

    input_: [K*B, 2]; hx = (h0 [K*B, 5], p0 [K*B, 1]).
    Rows MUST be particle-major (row = particle * B + batch) or the particle
    normalization / resampling below is silently wrong.
    """
    h0, p0 = hx
    N = h0.shape[0]
    K = num_particles
    assert N % K == 0, "rows must be particle-major: N == num_particles * batch"
    B = N // K

    # Single (N, 8) operand; p0 rides in col 7 (its weight row is zero).
    x8 = jnp.concatenate([h0, input_, p0], axis=-1)
    out = _pfrnn_pallas(x8, packed_params)                 # (N, 8)
    h1 = out[:, 0:H_DIM]
    p1 = out[:, H_DIM:H_DIM + 1].reshape(K, B, 1)
    p1 = p1 / jnp.sum(p1, axis=0, keepdims=True)           # normalize over particles

    # ---- soft resampling (randomness + data-dependent gather in plain JAX) ----
    alpha = RESAMP_ALPHA
    resamp_prob = alpha * p1 + (1.0 - alpha) / K            # [K, B, 1]
    logits = jnp.log(resamp_prob.reshape(K, B).T)           # [B, K]
    # torch.multinomial(resamp_prob.T, K, replacement=True).T -> [K, B]
    indices = jax.random.categorical(key, logits, axis=-1, shape=(K, B))
    offset = jnp.arange(B, dtype=indices.dtype)[None, :]
    flat_idx = (offset + indices * B).reshape(-1)           # [K*B]

    # TODO(synk): once the time loop moves onto the pallas grid, fuse this
    # gather via scalar-prefetched indices instead of an XLA gather.
    h1_new = h1[flat_idx]
    # Faithful to the PyTorch reference: exp() of the (linear) normalized weight.
    prob_new = jnp.exp(p1.reshape(-1, 1)[flat_idx])
    prob_new = prob_new / (alpha * prob_new + (1.0 - alpha) / K)
    prob_new = prob_new.reshape(K, B, 1)
    prob_new = prob_new / jnp.sum(prob_new, axis=0, keepdims=True)
    return h1_new, prob_new.reshape(-1, 1)


def garch_pfrnn_rollout(packed_params, inputs_T, hx0, key, num_particles):
    """T-step rollout under one jit/scan: dispatch amortized, packed slabs stay
    device-resident.  (Per-step kernel launch remains -- see TODO above.)"""
    T = inputs_T.shape[0]
    keys = jax.random.split(key, T)

    def step(carry, xt):
        inp_t, k_t = xt
        h1, p1 = garch_pfrnn_forward(packed_params, inp_t, carry, k_t,
                                     num_particles)
        return (h1, p1), None

    (hT, pT), _ = jax.lax.scan(step, hx0, (inputs_T, keys))
    return hT, pT


def init_raw_params(key):
    """Deterministic synthetic weights, W as [in, out], b as [out]
    (shapes implied by the PyTorch forward: fc_trans in = 7, fc_obs in = 2)."""
    dims = [(7, 200), (200, 200), (200, 200), (200, 100), (100, 1),   # fc_trans
            (2, 100), (100, 100), (100, 1)]                            # fc_obs
    raw = []
    for k, (din, dout) in zip(jax.random.split(key, len(dims)), dims):
        kw, kb = jax.random.split(k)
        scale = 1.0 / float(np.sqrt(din))
        W = jax.random.uniform(kw, (din, dout), jnp.float32, -scale, scale)
        b = jax.random.uniform(kb, (dout,), jnp.float32, -scale, scale)
        raw.append((W, b))
    return raw


def pack_params(raw):
    """Fold normalization / vol-affine constants into the weights and pack
    everything into 3 operands: w200 (bf16), w100 (bf16), aux (f32)."""
    (tw1, tb1), (tw2, tb2), (tw3, tb3), (tw4, tb4), (tw5, tb5), \
        (ow1, ob1), (ow2, ob2), (ow3, ob3) = [(np.asarray(w, np.float32),
                                               np.asarray(b, np.float32))
                                              for (w, b) in raw]

    # Fold (x - mean) / var into fc_trans_l1:  x@(W/var) + (b - (mean/var)@W)
    w1f = tw1 / _TRANS_VAR[:, None]                       # (7, 200)
    b1f = tb1 - (_TRANS_MEAN / _TRANS_VAR) @ tw1          # (200,)
    # Fold vol * VOL_VAR + VOL_MEAN into fc_trans_l5.
    w5f = tw5[:, 0] * _VOL_VAR                            # (100,)
    b5f = float(tb5[0]) * _VOL_VAR + _VOL_MEAN            # scalar

    w200 = np.zeros((432, 200), np.float32)
    w200[0:7] = w1f               # rows 0:5 = h0, 5:7 = input_, row 7 = 0 (p0)
    w200[16:216] = tw2            # 16-aligned starts for bf16 sublane packing
    w200[224:424] = tw3

    w100 = np.zeros((320, 100), np.float32)
    w100[0:200] = tw4
    w100[208:308] = ow2

    aux = np.zeros((16, 256), np.float32)
    aux[0, :200] = b1f
    aux[1, :200] = tb2
    aux[2, :200] = tb3
    aux[3, :100] = tb4
    aux[4, 0] = b5f
    aux[5, :100] = ob1
    aux[6, :100] = ob2
    aux[7, 0] = ob3[0]
    aux[8, :100] = w5f
    aux[9, :100] = ow3[:, 0]
    aux[10, :100] = ow1[0, :]     # fc_obs_l1 weight for vol
    aux[11, :100] = ow1[1, :]     # fc_obs_l1 weight for input_[:, -1]

    return (jnp.asarray(w200, jnp.bfloat16),
            jnp.asarray(w100, jnp.bfloat16),
            jnp.asarray(aux, jnp.float32))


if __name__ == "__main__":
    K = 16            # num_particles
    B = 8             # batch size
    N = K * B         # flattened rows, particle-major (row = particle*B + batch)

    key = jax.random.PRNGKey(0)
    kp, kh, kx, kr, ks = jax.random.split(key, 5)

    packed = pack_params(init_raw_params(kp))
    h0 = jax.random.normal(kh, (N, H_DIM), jnp.float32) * 0.1
    input_ = jax.random.normal(kx, (N, INPUT_SIZE), jnp.float32) * 0.1
    p0 = jnp.full((N, 1), 1.0 / K, dtype=jnp.float32)

    # Single step (matches the PyTorch forward).
    fwd = jax.jit(garch_pfrnn_forward, static_argnums=(4,))
    h1, p1 = fwd(packed, input_, (h0, p0), kr, K)
    jax.block_until_ready((h1, p1))
    assert h1.shape == (N, H_DIM) and p1.shape == (N, 1)
    assert bool(jnp.all(jnp.isfinite(h1))) and bool(jnp.all(jnp.isfinite(p1)))

    # Short rollout under one jit (perf feedback #1, lax.scan minimum).
    T = 4
    inputs_T = jax.random.normal(ks, (T, N, INPUT_SIZE), jnp.float32) * 0.1
    rollout = jax.jit(garch_pfrnn_rollout, static_argnums=(4,))
    hT, pT = rollout(packed, inputs_T, (h0, p0), kr, K)
    jax.block_until_ready((hT, pT))
    assert hT.shape == (N, H_DIM) and pT.shape == (N, 1)
    assert bool(jnp.all(jnp.isfinite(hT))) and bool(jnp.all(jnp.isfinite(pT)))

    print("KERNEL_OK")
</pallas_src>

<mosaic_0001>
module attributes {stable_mosaic.version = 11 : i64} {
  func.func @_pfrnn_kernel(%arg0: i32, %arg1: memref<128x8xf32, #tpu.memory_space<vmem>>, %arg2: memref<432x200xbf16, #tpu.memory_space<vmem>>, %arg3: memref<320x100xbf16, #tpu.memory_space<vmem>>, %arg4: memref<16x256xf32, #tpu.memory_space<vmem>>, %arg5: memref<128x8xf32, #tpu.memory_space<vmem>>) attributes {dimension_semantics = [#tpu.dimension_semantics<parallel>], iteration_bounds = array<i64: 1>, scalar_prefetch = 0 : i64, scratch_operands = 0 : i64, tpu.core_type = #tpu.core_type<tc>, window_params = [{transform_indices = @transform_0, window_bounds = array<i64: 128, 8>}, {pipeline_mode = #tpu.pipeline_mode<synchronous>, transform_indices = @transform_1, window_bounds = array<i64: 432, 200>}, {pipeline_mode = #tpu.pipeline_mode<synchronous>, transform_indices = @transform_2, window_bounds = array<i64: 320, 100>}, {pipeline_mode = #tpu.pipeline_mode<synchronous>, transform_indices = @transform_3, window_bounds = array<i64: 16, 256>}, {transform_indices = @transform_4, window_bounds = array<i64: 128, 8>}]} {
    %c0 = arith.constant 0 : index
    %c0_0 = arith.constant 0 : index
    %0 = vector.load %arg1[%c0, %c0_0] : memref<128x8xf32, #tpu.memory_space<vmem>>, vector<128x8xf32>
    %c0_1 = arith.constant 0 : index
    %c0_2 = arith.constant 0 : index
    %1 = vector.load %arg4[%c0_1, %c0_2] : memref<16x256xf32, #tpu.memory_space<vmem>>, vector<16x256xf32>
    %2 = arith.truncf %0 : vector<128x8xf32> to vector<128x8xbf16>
    %c0_3 = arith.constant 0 : index
    %c0_4 = arith.constant 0 : index
    %3 = vector.load %arg2[%c0_3, %c0_4] : memref<432x200xbf16, #tpu.memory_space<vmem>>, vector<8x200xbf16>
    %cst = arith.constant dense<0.000000e+00> : vector<128x200xf32>
    %4 = tpu.matmul %2, %3, %cst {dimension_numbers = #tpu.dot_dimension_numbers<[1], [0], [0], [1], [0, 0, 1, 1], [], []>} : vector<128x8xbf16>, vector<8x200xbf16>, vector<128x200xf32> -> vector<128x200xf32>
    %5 = vector.extract_strided_slice %1 {offsets = [0, 0], sizes = [1, 200], strides = [1, 1]} : vector<16x256xf32> to vector<1x200xf32>
    %6 = vector.broadcast %5 : vector<1x200xf32> to vector<128x200xf32>
    %7 = arith.addf %4, %6 : vector<128x200xf32>
    %8 = math.tanh %7 : vector<128x200xf32>
    %9 = arith.truncf %8 : vector<128x200xf32> to vector<128x200xbf16>
    %c16 = arith.constant 16 : index
    %c0_5 = arith.constant 0 : index
    %10 = vector.load %arg2[%c16, %c0_5] : memref<432x200xbf16, #tpu.memory_space<vmem>>, vector<200x200xbf16>
    %cst_6 = arith.constant dense<0.000000e+00> : vector<128x200xf32>
    %11 = tpu.matmul %9, %10, %cst_6 {dimension_numbers = #tpu.dot_dimension_numbers<[1], [0], [0], [1], [0, 0, 1, 1], [], []>} : vector<128x200xbf16>, vector<200x200xbf16>, vector<128x200xf32> -> vector<128x200xf32>
    %12 = vector.extract_strided_slice %1 {offsets = [1, 0], sizes = [1, 200], strides = [1, 1]} : vector<16x256xf32> to vector<1x200xf32>
    %13 = vector.broadcast %12 : vector<1x200xf32> to vector<128x200xf32>
    %14 = arith.addf %11, %13 : vector<128x200xf32>
    %15 = math.tanh %14 : vector<128x200xf32>
    %16 = arith.truncf %15 : vector<128x200xf32> to vector<128x200xbf16>
    %c224 = arith.constant 224 : index
    %c0_7 = arith.constant 0 : index
    %17 = vector.load %arg2[%c224, %c0_7] : memref<432x200xbf16, #tpu.memory_space<vmem>>, vector<200x200xbf16>
    %cst_8 = arith.constant dense<0.000000e+00> : vector<128x200xf32>
    %18 = tpu.matmul %16, %17, %cst_8 {dimension_numbers = #tpu.dot_dimension_numbers<[1], [0], [0], [1], [0, 0, 1, 1], [], []>} : vector<128x200xbf16>, vector<200x200xbf16>, vector<128x200xf32> -> vector<128x200xf32>
    %19 = vector.extract_strided_slice %1 {offsets = [2, 0], sizes = [1, 200], strides = [1, 1]} : vector<16x256xf32> to vector<1x200xf32>
    %20 = vector.broadcast %19 : vector<1x200xf32> to vector<128x200xf32>
    %21 = arith.addf %18, %20 : vector<128x200xf32>
    %22 = math.tanh %21 : vector<128x200xf32>
    %23 = arith.truncf %22 : vector<128x200xf32> to vector<128x200xbf16>
    %c0_9 = arith.constant 0 : index
    %c0_10 = arith.constant 0 : index
    %24 = vector.load %arg3[%c0_9, %c0_10] : memref<320x100xbf16, #tpu.memory_space<vmem>>, vector<200x100xbf16>
    %cst_11 = arith.constant dense<0.000000e+00> : vector<128x100xf32>
    %25 = tpu.matmul %23, %24, %cst_11 {dimension_numbers = #tpu.dot_dimension_numbers<[1], [0], [0], [1], [0, 0, 1, 1], [], []>} : vector<128x200xbf16>, vector<200x100xbf16>, vector<128x100xf32> -> vector<128x100xf32>
    %26 = vector.extract_strided_slice %1 {offsets = [3, 0], sizes = [1, 100], strides = [1, 1]} : vector<16x256xf32> to vector<1x100xf32>
    %27 = vector.broadcast %26 : vector<1x100xf32> to vector<128x100xf32>
    %28 = arith.addf %25, %27 : vector<128x100xf32>
    %29 = math.tanh %28 : vector<128x100xf32>
    %30 = vector.extract_strided_slice %1 {offsets = [8, 0], sizes = [1, 100], strides = [1, 1]} : vector<16x256xf32> to vector<1x100xf32>
    %31 = vector.broadcast %30 : vector<1x100xf32> to vector<128x100xf32>
    %32 = arith.mulf %29, %31 : vector<128x100xf32>
    %cst_12 = arith.constant dense<0.000000e+00> : vector<128xf32>
    %33 = vector.multi_reduction <add>, %32, %cst_12 [1] : vector<128x100xf32> to vector<128xf32>
    %34 = vector.shape_cast %33 : vector<128xf32> to vector<128x1xf32>
    %35 = vector.extract_strided_slice %1 {offsets = [4, 0], sizes = [1, 1], strides = [1, 1]} : vector<16x256xf32> to vector<1x1xf32>
    %36 = vector.broadcast %35 : vector<1x1xf32> to vector<128x1xf32>
    %37 = arith.addf %34, %36 : vector<128x1xf32>
    %38 = vector.extract_strided_slice %1 {offsets = [10, 0], sizes = [1, 100], strides = [1, 1]} : vector<16x256xf32> to vector<1x100xf32>
    %39 = vector.broadcast %37 : vector<128x1xf32> to vector<128x100xf32>
    %40 = vector.broadcast %38 : vector<1x100xf32> to vector<128x100xf32>
    %41 = arith.mulf %39, %40 : vector<128x100xf32>
    %42 = vector.extract_strided_slice %0 {offsets = [0, 6], sizes = [128, 1], strides = [1, 1]} : vector<128x8xf32> to vector<128x1xf32>
    %43 = vector.extract_strided_slice %1 {offsets = [11, 0], sizes = [1, 100], strides = [1, 1]} : vector<16x256xf32> to vector<1x100xf32>
    %44 = vector.broadcast %42 : vector<128x1xf32> to vector<128x100xf32>
    %45 = vector.broadcast %43 : vector<1x100xf32> to vector<128x100xf32>
    %46 = arith.mulf %44, %45 : vector<128x100xf32>
    %47 = arith.addf %41, %46 : vector<128x100xf32>
    %48 = vector.extract_strided_slice %1 {offsets = [5, 0], sizes = [1, 100], strides = [1, 1]} : vector<16x256xf32> to vector<1x100xf32>
    %49 = vector.broadcast %48 : vector<1x100xf32> to vector<128x100xf32>
    %50 = arith.addf %47, %49 : vector<128x100xf32>
    %cst_13 = arith.constant 5.000000e-01 : f32
    %51 = vector.broadcast %cst_13 : f32 to vector<128x100xf32>
    %52 = arith.mulf %51, %50 : vector<128x100xf32>
    %53 = math.tanh %52 : vector<128x100xf32>
    %cst_14 = arith.constant 1.000000e+00 : f32
    %54 = vector.broadcast %cst_14 : f32 to vector<128x100xf32>
    %55 = arith.addf %53, %54 : vector<128x100xf32>
    %cst_15 = arith.constant 5.000000e-01 : f32
    %56 = vector.broadcast %cst_15 : f32 to vector<128x100xf32>
    %57 = arith.mulf %56, %55 : vector<128x100xf32>
    %58 = arith.truncf %57 : vector<128x100xf32> to vector<128x100xbf16>
    %c208 = arith.constant 208 : index
    %c0_16 = arith.constant 0 : index
    %59 = vector.load %arg3[%c208, %c0_16] : memref<320x100xbf16, #tpu.memory_space<vmem>>, vector<100x100xbf16>
    %cst_17 = arith.constant dense<0.000000e+00> : vector<128x100xf32>
    %60 = tpu.matmul %58, %59, %cst_17 {dimension_numbers = #tpu.dot_dimension_numbers<[1], [0], [0], [1], [0, 0, 1, 1], [], []>} : vector<128x100xbf16>, vector<100x100xbf16>, vector<128x100xf32> -> vector<128x100xf32>
    %61 = vector.extract_strided_slice %1 {offsets = [6, 0], sizes = [1, 100], strides = [1, 1]} : vector<16x256xf32> to vector<1x100xf32>
    %62 = vector.broadcast %61 : vector<1x100xf32> to vector<128x100xf32>
    %63 = arith.addf %60, %62 : vector<128x100xf32>
    %cst_18 = arith.constant 5.000000e-01 : f32
    %64 = vector.broadcast %cst_18 : f32 to vector<128x100xf32>
    %65 = arith.mulf %64, %63 : vector<128x100xf32>
    %66 = math.tanh %65 : vector<128x100xf32>
    %cst_19 = arith.constant 1.000000e+00 : f32
    %67 = vector.broadcast %cst_19 : f32 to vector<128x100xf32>
    %68 = arith.addf %66, %67 : vector<128x100xf32>
    %cst_20 = arith.constant 5.000000e-01 : f32
    %69 = vector.broadcast %cst_20 : f32 to vector<128x100xf32>
    %70 = arith.mulf %69, %68 : vector<128x100xf32>
    %71 = vector.extract_strided_slice %1 {offsets = [9, 0], sizes = [1, 100], strides = [1, 1]} : vector<16x256xf32> to vector<1x100xf32>
    %72 = vector.broadcast %71 : vector<1x100xf32> to vector<128x100xf32>
    %73 = arith.mulf %70, %72 : vector<128x100xf32>
    %cst_21 = arith.constant dense<0.000000e+00> : vector<128xf32>
    %74 = vector.multi_reduction <add>, %73, %cst_21 [1] : vector<128x100xf32> to vector<128xf32>
    %75 = vector.shape_cast %74 : vector<128xf32> to vector<128x1xf32>
    %76 = vector.extract_strided_slice %1 {offsets = [7, 0], sizes = [1, 1], strides = [1, 1]} : vector<16x256xf32> to vector<1x1xf32>
    %77 = vector.broadcast %76 : vector<1x1xf32> to vector<128x1xf32>
    %78 = arith.addf %75, %77 : vector<128x1xf32>
    %cst_22 = arith.constant 5.000000e-01 : f32
    %79 = vector.broadcast %cst_22 : f32 to vector<128x1xf32>
    %80 = arith.mulf %79, %78 : vector<128x1xf32>
    %81 = math.tanh %80 : vector<128x1xf32>
    %cst_23 = arith.constant 1.000000e+00 : f32
    %82 = vector.broadcast %cst_23 : f32 to vector<128x1xf32>
    %83 = arith.addf %81, %82 : vector<128x1xf32>
    %cst_24 = arith.constant 5.000000e-01 : f32
    %84 = vector.broadcast %cst_24 : f32 to vector<128x1xf32>
    %85 = arith.mulf %84, %83 : vector<128x1xf32>
    %86 = vector.extract_strided_slice %0 {offsets = [0, 7], sizes = [128, 1], strides = [1, 1]} : vector<128x8xf32> to vector<128x1xf32>
    %87 = arith.mulf %85, %86 : vector<128x1xf32>
    %88 = tpu.iota {dimensions = array<i32: 1>} : vector<128x8xi32>
    %89 = vector.shape_cast %37 : vector<128x1xf32> to vector<128x1xf32>
    %90 = vector.broadcast %89 : vector<128x1xf32> to vector<128x8xf32>
    %91 = vector.shape_cast %87 : vector<128x1xf32> to vector<128x1xf32>
    %92 = vector.broadcast %91 : vector<128x1xf32> to vector<128x8xf32>
    %c4_i32 = arith.constant 4 : i32
    %93 = vector.broadcast %c4_i32 : i32 to vector<128x8xi32>
    %94 = arith.cmpi slt, %88, %93 : vector<128x8xi32>
    %c4_i32_25 = arith.constant 4 : i32
    %95 = vector.broadcast %c4_i32_25 : i32 to vector<128x8xi32>
    %96 = arith.cmpi eq, %88, %95 : vector<128x8xi32>
    %97 = arith.select %96, %90, %92 : vector<128x8xi1>, vector<128x8xf32>
    %98 = arith.select %94, %0, %97 : vector<128x8xi1>, vector<128x8xf32>
    %c0_26 = arith.constant 0 : index
    %c0_27 = arith.constant 0 : index
    %99 = vector.load %arg5[%c0_26, %c0_27] : memref<128x8xf32, #tpu.memory_space<vmem>>, vector<128x8xf32>
    tpu.vector_store %arg5[%c0_26, %c0_27], %98 {strides = array<i32>} : memref<128x8xf32, #tpu.memory_space<vmem>>, vector<128x8xf32>,
    return
  }
  func.func @transform_0(%arg0: i32) -> (i32, i32) {
    %c0_i32 = arith.constant 0 : i32
    %c0_i32_0 = arith.constant 0 : i32
    return %arg0, %c0_i32 : i32, i32
  }
  func.func @transform_1(%arg0: i32) -> (i32, i32) {
    %c0_i32 = arith.constant 0 : i32
    %c0_i32_0 = arith.constant 0 : i32
    %c0_i32_1 = arith.constant 0 : i32
    return %c0_i32, %c0_i32_0 : i32, i32
  }
  func.func @transform_2(%arg0: i32) -> (i32, i32) {
    %c0_i32 = arith.constant 0 : i32
    %c0_i32_0 = arith.constant 0 : i32
    %c0_i32_1 = arith.constant 0 : i32
    return %c0_i32, %c0_i32_0 : i32, i32
  }
  func.func @transform_3(%arg0: i32) -> (i32, i32) {
    %c0_i32 = arith.constant 0 : i32
    %c0_i32_0 = arith.constant 0 : i32
    %c0_i32_1 = arith.constant 0 : i32
    return %c0_i32, %c0_i32_0 : i32, i32
  }
  func.func @transform_4(%arg0: i32) -> (i32, i32) {
    %c0_i32 = arith.constant 0 : i32
    %c0_i32_0 = arith.constant 0 : i32
    return %arg0, %c0_i32 : i32, i32
  }
}

</mosaic_0001>

<llo_original>
// kernel: garch_pfrnn_forward.1
$region0: #{garch_pfrnn_forward.1}
  #allocation0 [shape = 'u32[]', space=smem, size = 0x4, offset = 0x4, fixed_abs, tag = 'smem constant byte address 0x4 - core index']
  #allocation1 [shape = 'u32[144,128]{1,0:T(1,128)}', space=vmem, size = 0x12000, scoped, tag = 'internal scratch']
  %s0 = inlined_call_operand.vmem [shape: f32[128,8], index: 0, kind: input, shape index: {}]
  %s1 = inlined_call_operand.vmem [shape: bf16[432,200], index: 1, kind: input, shape index: {}]
  %s2 = inlined_call_operand.vmem [shape: bf16[320,100], index: 2, kind: input, shape index: {}]
  %s3 = inlined_call_operand.vmem [shape: f32[16,256], index: 3, kind: input, shape index: {}]
  %s4 = inlined_call_operand.vmem [shape: f32[128,8], index: 4, kind: output, shape index: {}]
  %s5 = sld [smem:[#allocation0]]
  $region26: #{garch_pfrnn_forward.1} parent=0
    _
  %s7 = ssub.s32 1, %s5
  %s8 = scalar_select 0, %s7, %s5
  // Predicated region
  $region2: #{garch_pfrnn_forward.1} parent=0 // pred_check
    _
  $region3: #{garch_pfrnn_forward.1} parent=0 // pred_check_branch
    %10 = sbr.rel (0) target = $region5
  $region4: #{garch_pfrnn_forward.1} parent=0 // pred_region
    _
  $region5: #{garch_pfrnn_forward.1} parent=0 // pred_fallthru
    _
  // Predicated region
  $region6: #{garch_pfrnn_forward.1} parent=0 // pred_check
    _
  $region7: #{garch_pfrnn_forward.1} parent=0 // pred_check_branch
    %12 = sbr.rel (0) target = $region9
  $region8: #{garch_pfrnn_forward.1} parent=0 // pred_region
    _
  $region9: #{garch_pfrnn_forward.1} parent=0 // pred_fallthru
    _
  // Predicated region
  $region10: #{garch_pfrnn_forward.1} parent=0 // pred_check
    _
  $region11: #{garch_pfrnn_forward.1} parent=0 // pred_check_branch
    %14 = sbr.rel (0) target = $region13
  $region12: #{garch_pfrnn_forward.1} parent=0 // pred_region
    _
  $region13: #{garch_pfrnn_forward.1} parent=0 // pred_fallthru
    _
  // Predicated region
  $region14: #{garch_pfrnn_forward.1} parent=0 // pred_check
    _
  $region15: #{garch_pfrnn_forward.1} parent=0 // pred_check_branch
    %16 = sbr.rel (0) target = $region17
  $region16: #{garch_pfrnn_forward.1} parent=0 // pred_region
    _
  $region17: #{garch_pfrnn_forward.1} parent=0 // pred_fallthru
    _
  %v18 = vld [vmem:[%s0] sm:$0xff]
  %v19 = vld [vmem:[%s0 + $0x8] sm:$0xff]
  %v20 = vld [vmem:[%s0 + $0x10] sm:$0xff]
  %v21 = vld [vmem:[%s0 + $0x18] sm:$0xff]
  %v22 = vld [vmem:[%s0 + $0x20] sm:$0xff]
  %v23 = vld [vmem:[%s0 + $0x28] sm:$0xff]
  %v24 = vld [vmem:[%s0 + $0x30] sm:$0xff]
  %v25 = vld [vmem:[%s0 + $0x38] sm:$0xff]
  %v26 = vld [vmem:[%s0 + $0x40] sm:$0xff]
  %v27 = vld [vmem:[%s0 + $0x48] sm:$0xff]
  %v28 = vld [vmem:[%s0 + $0x50] sm:$0xff]
  %v29 = vld [vmem:[%s0 + $0x58] sm:$0xff]
  %v30 = vld [vmem:[%s0 + $0x60] sm:$0xff]
  %v31 = vld [vmem:[%s0 + $0x68] sm:$0xff]
  %v32 = vld [vmem:[%s0 + $0x70] sm:$0xff]
  %v33 = vld [vmem:[%s0 + $0x78] sm:$0xff]
  %v34 = vld [vmem:[%s3] sm:$0xff]
  %v35 = vld [vmem:[%s3 + $0x8] sm:$0xff]
  %v36 = vld [vmem:[%s3 + $0x10] sm:$0xff]
  %v37 = vpack.c.bf16 %v19, %v18
  %v38 = vpack.c.bf16 %v21, %v20
  %v39 = vpack.c.bf16 %v23, %v22
  %v40 = vpack.c.bf16 %v25, %v24
  %v41 = vpack.c.bf16 %v27, %v26
  %v42 = vpack.c.bf16 %v29, %v28
  %v43 = vpack.c.bf16 %v31, %v30
  %v44 = vpack.c.bf16 %v33, %v32
  %v45 = vld [vmem:[%s1] sm:$0xff]
  %v46 = vlaneseq
  %v47 = vshrl.u32 %v46, 7
  %v48 = vsub.s32 0, %v47
  %v49 = vrot.slane %v34, %v48
  %v50 = vlaneseq
  %v51 = vshrl.u32 %v50, 7
  %v52 = vsub.s32 0, %v51
  %v53 = vrot.slane %v35, %v52
  %v55 = vunpack.c.l.b16 %v45
  %v56 = vunpack.c.h.b16 %v45
  %v57 = vpack.c.b16 %v55, %v55
  %v58 = vpack.c.b16 %v56, %v56
  %vm59 = vcmask 64512
  %v61 = vsel %vm59, %v37, 0
  %v64 = vsel %vm59, %v38, 0
  %v67 = vsel %vm59, %v39, 0
  %v70 = vsel %vm59, %v40, 0
  %v73 = vsel %vm59, %v41, 0
  %v76 = vsel %vm59, %v42, 0
  %v79 = vsel %vm59, %v43, 0
  %v82 = vsel %vm59, %v44, 0
  %vm84 = vcmask 1043456
  %v86 = vsel %vm84, %v57, 0
  %v89 = vsel %vm84, %v58, 0
  %91 = vmatprep.subr.bf16.mxu0 %v89
  %92 = vmatpush1.bf16.msra.mxu0 %v86
  %93 = vmatprep.subr.bf16.mxu0 0
  %94 = vmatpush1.bf16.msra.mxu0 0
  %95 = vmatprep.subr.bf16.mxu0 0
  %96 = vmatpush1.bf16.msra.mxu0 0
  %97 = vmatprep.subr.bf16.mxu0 0
  %98 = vmatpush1.bf16.msra.mxu0 0
  %99 = vmatprep.subr.bf16.mxu0 0
  %100 = vmatpush1.bf16.msra.mxu0 0
  %101 = vmatprep.subr.bf16.mxu0 0
  %102 = vmatpush1.bf16.msra.mxu0 0
  %103 = vmatprep.subr.bf16.mxu0 0
  %104 = vmatpush1.bf16.msra.mxu0 0
  %105 = vmatprep.subr.bf16.mxu0 0
  %106 = vmatpush1.bf16.msra.mxu0 0
  %107 = vmatprep.subr.bf16.mxu0 0
  %108 = vmatpush1.bf16.msra.mxu0 0
  %109 = vmatprep.subr.bf16.mxu0 0
  %110 = vmatpush1.bf16.msra.mxu0 0
  %111 = vmatprep.subr.bf16.mxu0 0
  %112 = vmatpush1.bf16.msra.mxu0 0
  %113 = vmatprep.subr.bf16.mxu0 0
  %114 = vmatpush1.bf16.msra.mxu0 0
  %115 = vmatprep.subr.bf16.mxu0 0
  %116 = vmatpush1.bf16.msra.mxu0 0
  %117 = vmatprep.subr.bf16.mxu0 0
  %118 = vmatpush1.bf16.msra.mxu0 0
  %119 = vmatprep.subr.bf16.mxu0 0
  %120 = vmatpush1.bf16.msra.mxu0 0
  %121 = vmatprep.subr.bf16.mxu0 0
  %122 = vmatpush1.bf16.msra.mxu0 0
  %123 = vmatprep.mubr.bf16.mxu0 0
  %124 = vmatmul.mubr.bf16.gmra.mrb[0].mxu0 %v61
  %v125 = vpop.f32.mrb[0].mxu0
  %v126 = vadd.f32 %v49, %v125
  %v127 = vpop.f32.mrb[0].mxu0
  %v128 = vadd.f32 %v53, %v127
  %v129 = vpop.f32.mrb[0].mxu0
  %v130 = vadd.f32 %v49, %v129
  %v131 = vpop.f32.mrb[0].mxu0
  %v132 = vadd.f32 %v53, %v131
  %133 = vmatprep.mubr.bf16.mxu0 0
  %134 = vmatmul.mubr.bf16.gmra.mrb[0].mxu0 %v64
  %v135 = vpop.f32.mrb[0].mxu0
  %v136 = vadd.f32 %v49, %v135
  %v137 = vpop.f32.mrb[0].mxu0
  %v138 = vadd.f32 %v53, %v137
  %v139 = vpop.f32.mrb[0].mxu0
  %v140 = vadd.f32 %v49, %v139
  %v141 = vpop.f32.mrb[0].mxu0
  %v142 = vadd.f32 %v53, %v141
  %143 = vmatprep.mubr.bf16.mxu0 0
  %144 = vmatmul.mubr.bf16.gmra.mrb[0].mxu0 %v67
  %v145 = vpop.f32.mrb[0].mxu0
  %v146 = vadd.f32 %v49, %v145
  %v147 = vpop.f32.mrb[0].mxu0
  %v148 = vadd.f32 %v53, %v147
  %v149 = vpop.f32.mrb[0].mxu0
  %v150 = vadd.f32 %v49, %v149
  %v151 = vpop.f32.mrb[0].mxu0
  %v152 = vadd.f32 %v53, %v151
  %153 = vmatprep.mubr.bf16.mxu0 0
  %154 = vmatmul.mubr.bf16.gmra.mrb[0].mxu0 %v70
  %v155 = vpop.f32.mrb[0].mxu0
  %v156 = vadd.f32 %v49, %v155
  %v157 = vpop.f32.mrb[0].mxu0
  %v158 = vadd.f32 %v53, %v157
  %v159 = vpop.f32.mrb[0].mxu0
  %v160 = vadd.f32 %v49, %v159
  %v161 = vpop.f32.mrb[0].mxu0
  %v162 = vadd.f32 %v53, %v161
  %163 = vmatprep.mubr.bf16.mxu0 0
  %164 = vmatmul.mubr.bf16.gmra.mrb[0].mxu0 %v73
  %v165 = vpop.f32.mrb[0].mxu0
  %v166 = vadd.f32 %v49, %v165
  %v167 = vpop.f32.mrb[0].mxu0
  %v168 = vadd.f32 %v53, %v167
  %v169 = vpop.f32.mrb[0].mxu0
  %v170 = vadd.f32 %v49, %v169
  %v171 = vpop.f32.mrb[0].mxu0
  %v172 = vadd.f32 %v53, %v171
  %173 = vmatprep.mubr.bf16.mxu0 0
  %174 = vmatmul.mubr.bf16.gmra.mrb[0].mxu0 %v76
  %v175 = vpop.f32.mrb[0].mxu0
  %v176 = vadd.f32 %v49, %v175
  %v177 = vpop.f32.mrb[0].mxu0
  %v178 = vadd.f32 %v53, %v177
  %v179 = vpop.f32.mrb[0].mxu0
  %v180 = vadd.f32 %v49, %v179
  %v181 = vpop.f32.mrb[0].mxu0
  %v182 = vadd.f32 %v53, %v181
  %183 = vmatprep.mubr.bf16.mxu0 0
  %184 = vmatmul.mubr.bf16.gmra.mrb[0].mxu0 %v79
  %v185 = vpop.f32.mrb[0].mxu0
  %v186 = vadd.f32 %v49, %v185
  %v187 = vpop.f32.mrb[0].mxu0
  %v188 = vadd.f32 %v53, %v187
  %v189 = vpop.f32.mrb[0].mxu0
  %v190 = vadd.f32 %v49, %v189
  %v191 = vpop.f32.mrb[0].mxu0
  %v192 = vadd.f32 %v53, %v191
  %193 = vmatprep.mubr.bf16.mxu0 0
  %194 = vmatmul.mubr.bf16.gmra.mrb[0].mxu0 %v82
  %v195 = vpop.f32.mrb[0].mxu0
  %v196 = vadd.f32 %v49, %v195
  %v197 = vpop.f32.mrb[0].mxu0
  %v198 = vadd.f32 %v53, %v197
  %v199 = vpop.f32.mrb[0].mxu0
  %v200 = vadd.f32 %v49, %v199
  %v201 = vpop.f32.mrb[0].mxu0
  %v202 = vadd.f32 %v53, %v201
  %203 = vdwg.mxu0
  %v204 = vtanh.pop %v126
  %v205 = vtanh.pop %v128
  %v206 = vtanh.pop %v130
  %v207 = vtanh.pop %v132
  %v208 = vtanh.pop %v136
  %v209 = vtanh.pop %v138
  %v210 = vtanh.pop %v140
  %v211 = vtanh.pop %v142
  %v212 = vtanh.pop %v146
  %v213 = vtanh.pop %v148
  %v214 = vtanh.pop %v150
  %v215 = vtanh.pop %v152
  %v216 = vtanh.pop %v156
  %v217 = vtanh.pop %v158
  %v218 = vtanh.pop %v160
  %v219 = vtanh.pop %v162
  %v220 = vtanh.pop %v166
  %v221 = vtanh.pop %v168
  %v222 = vtanh.pop %v170
  %v223 = vtanh.pop %v172
  %v224 = vtanh.pop %v176
  %v225 = vtanh.pop %v178
  %v226 = vtanh.pop %v180
  %v227 = vtanh.pop %v182
  %v228 = vtanh.pop %v186
  %v229 = vtanh.pop %v188
  %v230 = vtanh.pop %v190
  %v231 = vtanh.pop %v192
  %v232 = vtanh.pop %v196
  %v233 = vtanh.pop %v198
  %v234 = vtanh.pop %v200
  %v235 = vtanh.pop %v202
  %v236 = vpack.c.bf16 %v206, %v204
  %v237 = vpack.c.bf16 %v207, %v205
  %v238 = vpack.c.bf16 %v210, %v208
  %v239 = vpack.c.bf16 %v211, %v209
  %v240 = vpack.c.bf16 %v214, %v212
  %v241 = vpack.c.bf16 %v215, %v213
  %v242 = vpack.c.bf16 %v218, %v216
  %v243 = vpack.c.bf16 %v219, %v217
  %v244 = vpack.c.bf16 %v222, %v220
  %v245 = vpack.c.bf16 %v223, %v221
  %v246 = vpack.c.bf16 %v226, %v224
  %v247 = vpack.c.bf16 %v227, %v225
  %v248 = vpack.c.bf16 %v230, %v228
  %v249 = vpack.c.bf16 %v231, %v229
  %v250 = vpack.c.bf16 %v234, %v232
  %v251 = vpack.c.bf16 %v235, %v233
  %v252 = vld [vmem:[%s1 + $0x10] sm:$0xff]
  %v253 = vld [vmem:[%s1 + $0x18] sm:$0xff]
  %v254 = vld [vmem:[%s1 + $0x20] sm:$0xff]
  %v255 = vld [vmem:[%s1 + $0x28] sm:$0xff]
  %v256 = vld [vmem:[%s1 + $0x30] sm:$0xff]
  %v257 = vld [vmem:[%s1 + $0x38] sm:$0xff]
  %v258 = vld [vmem:[%s1 + $0x40] sm:$0xff]
  %v259 = vld [vmem:[%s1 + $0x48] sm:$0xff]
  %v260 = vld [vmem:[%s1 + $0x50] sm:$0xff]
  %v261 = vld [vmem:[%s1 + $0x58] sm:$0xff]
  %v262 = vld [vmem:[%s1 + $0x60] sm:$0xff]
  %v263 = vld [vmem:[%s1 + $0x68] sm:$0xff]
  %v264 = vld [vmem:[%s1 + $0x70] sm:$0xff]
  %v265 = vld [vmem:[%s1 + $0x78] sm:$0xff]
  %v266 = vld [vmem:[%s1 + $0x80] sm:$0xff]
  %v267 = vld [vmem:[%s1 + $0x88] sm:$0xff]
  %v268 = vld [vmem:[%s1 + $0x90] sm:$0xff]
  %v269 = vld [vmem:[%s1 + $0x98] sm:$0xff]
  %v270 = vld [vmem:[%s1 + $0xa0] sm:$0xff]
  %v271 = vld [vmem:[%s1 + $0xa8] sm:$0xff]
  %v272 = vld [vmem:[%s1 + $0xb0] sm:$0xff]
  %v273 = vld [vmem:[%s1 + $0xb8] sm:$0xff]
  %v274 = vld [vmem:[%s1 + $0xc0] sm:$0xff]
  %v275 = vld [vmem:[%s1 + $0xc8] sm:$0xff]
  %v276 = vld [vmem:[%s1 + $0xd0] sm:$0xff]
  %v277 = vlaneseq
  %v278 = vshrl.u32 %v277, 7
  %v279 = vsub.s32 1, %v278
  %v280 = vrot.slane %v34, %v279
  %v281 = vlaneseq
  %v282 = vshrl.u32 %v281, 7
  %v283 = vsub.s32 1, %v282
  %v284 = vrot.slane %v35, %v283
  %v310 = vunpack.c.l.b16 %v252
  %v311 = vunpack.c.h.b16 %v252
  %v312 = vunpack.c.l.b16 %v253
  %v313 = vunpack.c.h.b16 %v253
  %v314 = vunpack.c.l.b16 %v254
  %v315 = vunpack.c.h.b16 %v254
  %v316 = vunpack.c.l.b16 %v255
  %v317 = vunpack.c.h.b16 %v255
  %v318 = vunpack.c.l.b16 %v256
  %v319 = vunpack.c.h.b16 %v256
  %v320 = vunpack.c.l.b16 %v257
  %v321 = vunpack.c.h.b16 %v257
  %v322 = vunpack.c.l.b16 %v258
  %v323 = vunpack.c.h.b16 %v258
  %v324 = vunpack.c.l.b16 %v259
  %v325 = vunpack.c.h.b16 %v259
  %v326 = vunpack.c.l.b16 %v260
  %v327 = vunpack.c.h.b16 %v260
  %v328 = vunpack.c.l.b16 %v261
  %v329 = vunpack.c.h.b16 %v261
  %v330 = vunpack.c.l.b16 %v262
  %v331 = vunpack.c.h.b16 %v262
  %v332 = vunpack.c.l.b16 %v263
  %v333 = vunpack.c.h.b16 %v263
  %v334 = vunpack.c.l.b16 %v264
  %v335 = vunpack.c.h.b16 %v264
  %v336 = vunpack.c.l.b16 %v265
  %v337 = vunpack.c.h.b16 %v265
  %v338 = vunpack.c.l.b16 %v266
  %v339 = vunpack.c.h.b16 %v266
  %v340 = vunpack.c.l.b16 %v267
  %v341 = vunpack.c.h.b16 %v267
  %v342 = vunpack.c.l.b16 %v268
  %v343 = vunpack.c.h.b16 %v268
  %v344 = vunpack.c.l.b16 %v269
  %v345 = vunpack.c.h.b16 %v269
  %v346 = vunpack.c.l.b16 %v270
  %v347 = vunpack.c.h.b16 %v270
  %v348 = vunpack.c.l.b16 %v271
  %v349 = vunpack.c.h.b16 %v271
  %v350 = vunpack.c.l.b16 %v272
  %v351 = vunpack.c.h.b16 %v272
  %v352 = vunpack.c.l.b16 %v273
  %v353 = vunpack.c.h.b16 %v273
  %v354 = vunpack.c.l.b16 %v274
  %v355 = vunpack.c.h.b16 %v274
  %v356 = vunpack.c.l.b16 %v275
  %v357 = vunpack.c.h.b16 %v275
  %v358 = vunpack.c.l.b16 %v276
  %v359 = vunpack.c.h.b16 %v276
  %v360 = vpack.c.b16 %v312, %v310
  %v361 = vpack.c.b16 %v313, %v311
  %v362 = vpack.c.b16 %v316, %v314
  %v363 = vpack.c.b16 %v317, %v315
  %v364 = vpack.c.b16 %v320, %v318
  %v365 = vpack.c.b16 %v321, %v319
  %v366 = vpack.c.b16 %v324, %v322
  %v367 = vpack.c.b16 %v325, %v323
  %v368 = vpack.c.b16 %v328, %v326
  %v369 = vpack.c.b16 %v329, %v327
  %v370 = vpack.c.b16 %v332, %v330
  %v371 = vpack.c.b16 %v333, %v331
  %v372 = vpack.c.b16 %v336, %v334
  %v373 = vpack.c.b16 %v337, %v335
  %v374 = vpack.c.b16 %v340, %v338
  %v375 = vpack.c.b16 %v341, %v339
  %v376 = vpack.c.b16 %v344, %v342
  %v377 = vpack.c.b16 %v345, %v343
  %v378 = vpack.c.b16 %v348, %v346
  %v379 = vpack.c.b16 %v349, %v347
  %v380 = vpack.c.b16 %v352, %v350
  %v381 = vpack.c.b16 %v353, %v351
  %v382 = vpack.c.b16 %v356, %v354
  %v383 = vpack.c.b16 %v357, %v355
  %v384 = vpack.c.b16 %v358, %v358
  %v385 = vpack.c.b16 %v359, %v359
  %vm410 = vcmask 588800
  %v412 = vsel %vm410, %v237, 0
  %v415 = vsel %vm410, %v239, 0
  %v418 = vsel %vm410, %v241, 0
  %v421 = vsel %vm410, %v243, 0
  %v424 = vsel %vm410, %v245, 0
  %v427 = vsel %vm410, %v247, 0
  %v430 = vsel %vm410, %v249, 0
  %v433 = vsel %vm410, %v251, 0
  %v436 = vsel %vm84, %v384, 0
  %v439 = vsel %vm84, %v385, 0
  %441 = vmatprep.subr.bf16.mxu0 %v361
  %442 = vmatpush1.bf16.msra.mxu0 %v360
  %443 = vmatprep.subr.bf16.mxu0 %v363
  %444 = vmatpush1.bf16.msra.mxu0 %v362
  %445 = vmatprep.subr.bf16.mxu0 %v365
  %446 = vmatpush1.bf16.msra.mxu0 %v364
  %447 = vmatprep.subr.bf16.mxu0 %v367
  %448 = vmatpush1.bf16.msra.mxu0 %v366
  %449 = vmatprep.subr.bf16.mxu0 %v369
  %450 = vmatpush1.bf16.msra.mxu0 %v368
  %451 = vmatprep.subr.bf16.mxu0 %v371
  %452 = vmatpush1.bf16.msra.mxu0 %v370
  %453 = vmatprep.subr.bf16.mxu0 %v373
  %454 = vmatpush1.bf16.msra.mxu0 %v372
  %455 = vmatprep.subr.bf16.mxu0 %v375
  %456 = vmatpush1.bf16.msra.mxu0 %v374
  %457 = vmatprep.subr.bf16.mxu0 %v377
  %458 = vmatpush1.bf16.msra.mxu0 %v376
  %459 = vmatprep.subr.bf16.mxu0 %v379
  %460 = vmatpush1.bf16.msra.mxu0 %v378
  %461 = vmatprep.subr.bf16.mxu0 %v381
  %462 = vmatpush1.bf16.msra.mxu0 %v380
  %463 = vmatprep.subr.bf16.mxu0 %v383
  %464 = vmatpush1.bf16.msra.mxu0 %v382
  %465 = vmatprep.subr.bf16.mxu0 %v439
  %466 = vmatpush1.bf16.msra.mxu0 %v436
  %467 = vmatprep.subr.bf16.mxu0 0
  %468 = vmatpush1.bf16.msra.mxu0 0
  %469 = vmatprep.subr.bf16.mxu0 0
  %470 = vmatpush1.bf16.msra.mxu0 0
  %471 = vmatprep.subr.bf16.mxu0 0
  %472 = vmatpush1.bf16.msra.mxu0 0
  %473 = vmatprep.mubr.bf16.mxu0 %v412
  %474 = vmatmul.mubr.bf16.gmra.mrb[0].mxu0 %v236
  %v475 = vpop.f32.mrb[0].mxu0
  %v476 = vadd.f32 %v280, %v475
  %v477 = vpop.f32.mrb[0].mxu0
  %v478 = vadd.f32 %v284, %v477
  %v479 = vpop.f32.mrb[0].mxu0
  %v480 = vadd.f32 %v280, %v479
  %v481 = vpop.f32.mrb[0].mxu0
  %v482 = vadd.f32 %v284, %v481
  %483 = vmatprep.mubr.bf16.mxu0 %v415
  %484 = vmatmul.mubr.bf16.gmra.mrb[0].mxu0 %v238
  %v485 = vpop.f32.mrb[0].mxu0
  %v486 = vadd.f32 %v280, %v485
  %v487 = vpop.f32.mrb[0].mxu0
  %v488 = vadd.f32 %v284, %v487
  %v489 = vpop.f32.mrb[0].mxu0
  %v490 = vadd.f32 %v280, %v489
  %v491 = vpop.f32.mrb[0].mxu0
  %v492 = vadd.f32 %v284, %v491
  %493 = vmatprep.mubr.bf16.mxu0 %v418
  %494 = vmatmul.mubr.bf16.gmra.mrb[0].mxu0 %v240
  %v495 = vpop.f32.mrb[0].mxu0
  %v496 = vadd.f32 %v280, %v495
  %v497 = vpop.f32.mrb[0].mxu0
  %v498 = vadd.f32 %v284, %v497
  %v499 = vpop.f32.mrb[0].mxu0
  %v500 = vadd.f32 %v280, %v499
  %v501 = vpop.f32.mrb[0].mxu0
  %v502 = vadd.f32 %v284, %v501
  %503 = vmatprep.mubr.bf16.mxu0 %v421
  %504 = vmatmul.mubr.bf16.gmra.mrb[0].mxu0 %v242
  %v505 = vpop.f32.mrb[0].mxu0
  %v506 = vadd.f32 %v280, %v505
  %v507 = vpop.f32.mrb[0].mxu0
  %v508 = vadd.f32 %v284, %v507
  %v509 = vpop.f32.mrb[0].mxu0
  %v510 = vadd.f32 %v280, %v509
  %v511 = vpop.f32.mrb[0].mxu0
  %v512 = vadd.f32 %v284, %v511
  %513 = vmatprep.mubr.bf16.mxu0 %v424
  %514 = vmatmul.mubr.bf16.gmra.mrb[0].mxu0 %v244
  %v515 = vpop.f32.mrb[0].mxu0
  %v516 = vadd.f32 %v280, %v515
  %v517 = vpop.f32.mrb[0].mxu0
  %v518 = vadd.f32 %v284, %v517
  %v519 = vpop.f32.mrb[0].mxu0
  %v520 = vadd.f32 %v280, %v519
  %v521 = vpop.f32.mrb[0].mxu0
  %v522 = vadd.f32 %v284, %v521
  %523 = vmatprep.mubr.bf16.mxu0 %v427
  %524 = vmatmul.mubr.bf16.gmra.mrb[0].mxu0 %v246
  %v525 = vpop.f32.mrb[0].mxu0
  %v526 = vadd.f32 %v280, %v525
  %v527 = vpop.f32.mrb[0].mxu0
  %v528 = vadd.f32 %v284, %v527
  %v529 = vpop.f32.mrb[0].mxu0
  %v530 = vadd.f32 %v280, %v529
  %v531 = vpop.f32.mrb[0].mxu0
  %v532 = vadd.f32 %v284, %v531
  %533 = vmatprep.mubr.bf16.mxu0 %v430
  %534 = vmatmul.mubr.bf16.gmra.mrb[0].mxu0 %v248
  %v535 = vpop.f32.mrb[0].mxu0
  %v536 = vadd.f32 %v280, %v535
  %v537 = vpop.f32.mrb[0].mxu0
  %v538 = vadd.f32 %v284, %v537
  %v539 = vpop.f32.mrb[0].mxu0
  %v540 = vadd.f32 %v280, %v539
  %v541 = vpop.f32.mrb[0].mxu0
  %v542 = vadd.f32 %v284, %v541
  %543 = vmatprep.mubr.bf16.mxu0 %v433
  %544 = vmatmul.mubr.bf16.gmra.mrb[0].mxu0 %v250
  %v545 = vpop.f32.mrb[0].mxu0
  %v546 = vadd.f32 %v280, %v545
  %v547 = vpop.f32.mrb[0].mxu0
  %v548 = vadd.f32 %v284, %v547
  %v549 = vpop.f32.mrb[0].mxu0
  %v550 = vadd.f32 %v280, %v549
  %v551 = vpop.f32.mrb[0].mxu0
  %v552 = vadd.f32 %v284, %v551
  %553 = vdwg.mxu0
  %v554 = vtanh.pop %v476
  %v555 = vtanh.pop %v478
  %v556 = vtanh.pop %v480
  %v557 = vtanh.pop %v482
  %v558 = vtanh.pop %v486
  %v559 = vtanh.pop %v488
  %v560 = vtanh.pop %v490
  %v561 = vtanh.pop %v492
  %v562 = vtanh.pop %v496
  %v563 = vtanh.pop %v498
  %v564 = vtanh.pop %v500
  %v565 = vtanh.pop %v502
  %v566 = vtanh.pop %v506
  %v567 = vtanh.pop %v508
  %v568 = vtanh.pop %v510
  %v569 = vtanh.pop %v512
  %v570 = vtanh.pop %v516
  %v571 = vtanh.pop %v518
  %v572 = vtanh.pop %v520
  %v573 = vtanh.pop %v522
  %v574 = vtanh.pop %v526
  %v575 = vtanh.pop %v528
  %v576 = vtanh.pop %v530
  %v577 = vtanh.pop %v532
  %v578 = vtanh.pop %v536
  %v579 = vtanh.pop %v538
  %v580 = vtanh.pop %v540
  %v581 = vtanh.pop %v542
  %v582 = vtanh.pop %v546
  %v583 = vtanh.pop %v548
  %v584 = vtanh.pop %v550
  %v585 = vtanh.pop %v552
  %v586 = vpack.c.bf16 %v556, %v554
  %v587 = vpack.c.bf16 %v557, %v555
  %v588 = vpack.c.bf16 %v560, %v558
  %v589 = vpack.c.bf16 %v561, %v559
  %v590 = vpack.c.bf16 %v564, %v562
  %v591 = vpack.c.bf16 %v565, %v563
  %v592 = vpack.c.bf16 %v568, %v566
  %v593 = vpack.c.bf16 %v569, %v567
  %v594 = vpack.c.bf16 %v572, %v570
  %v595 = vpack.c.bf16 %v573, %v571
  %v596 = vpack.c.bf16 %v576, %v574
  %v597 = vpack.c.bf16 %v577, %v575
  %v598 = vpack.c.bf16 %v580, %v578
  %v599 = vpack.c.bf16 %v581, %v579
  %v600 = vpack.c.bf16 %v584, %v582
  %v601 = vpack.c.bf16 %v585, %v583
  %v602 = vld [vmem:[%s1 + $0xe0] sm:$0xff]
  %v603 = vld [vmem:[%s1 + $0xe8] sm:$0xff]
  %v604 = vld [vmem:[%s1 + $0xf0] sm:$0xff]
  %v605 = vld [vmem:[%s1 + $0xf8] sm:$0xff]
  %v606 = vld [vmem:[%s1 + $0x100] sm:$0xff]
  %v607 = vld [vmem:[%s1 + $0x108] sm:$0xff]
  %v608 = vld [vmem:[%s1 + $0x110] sm:$0xff]
  %v609 = vld [vmem:[%s1 + $0x118] sm:$0xff]
  %v610 = vld [vmem:[%s1 + $0x120] sm:$0xff]
  %v611 = vld [vmem:[%s1 + $0x128] sm:$0xff]
  %v612 = vld [vmem:[%s1 + $0x130] sm:$0xff]
  %v613 = vld [vmem:[%s1 + $0x138] sm:$0xff]
  %v614 = vld [vmem:[%s1 + $0x140] sm:$0xff]
  %v615 = vld [vmem:[%s1 + $0x148] sm:$0xff]
  %v616 = vld [vmem:[%s1 + $0x150] sm:$0xff]
  %v617 = vld [vmem:[%s1 + $0x158] sm:$0xff]
  %v618 = vld [vmem:[%s1 + $0x160] sm:$0xff]
  %v619 = vld [vmem:[%s1 + $0x168] sm:$0xff]
  %v620 = vld [vmem:[%s1 + $0x170] sm:$0xff]
  %v621 = vld [vmem:[%s1 + $0x178] sm:$0xff]
  %v622 = vld [vmem:[%s1 + $0x180] sm:$0xff]
  %v623 = vld [vmem:[%s1 + $0x188] sm:$0xff]
  %v624 = vld [vmem:[%s1 + $0x190] sm:$0xff]
  %v625 = vld [vmem:[%s1 + $0x198] sm:$0xff]
  %v626 = vld [vmem:[%s1 + $0x1a0] sm:$0xff]
  %v627 = vlaneseq
  %v628 = vshrl.u32 %v627, 7
  %v629 = vsub.s32 2, %v628
  %v630 = vrot.slane %v34, %v629
  %v631 = vlaneseq
  %v632 = vshrl.u32 %v631, 7
  %v633 = vsub.s32 2, %v632
  %v634 = vrot.slane %v35, %v633
  %v660 = vunpack.c.l.b16 %v602
  %v661 = vunpack.c.h.b16 %v602
  %v662 = vunpack.c.l.b16 %v603
  %v663 = vunpack.c.h.b16 %v603
  %v664 = vunpack.c.l.b16 %v604
  %v665 = vunpack.c.h.b16 %v604
  %v666 = vunpack.c.l.b16 %v605
  %v667 = vunpack.c.h.b16 %v605
  %v668 = vunpack.c.l.b16 %v606
  %v669 = vunpack.c.h.b16 %v606
  %v670 = vunpack.c.l.b16 %v607
  %v671 = vunpack.c.h.b16 %v607
  %v672 = vunpack.c.l.b16 %v608
  %v673 = vunpack.c.h.b16 %v608
  %v674 = vunpack.c.l.b16 %v609
  %v675 = vunpack.c.h.b16 %v609
  %v676 = vunpack.c.l.b16 %v610
  %v677 = vunpack.c.h.b16 %v610
  %v678 = vunpack.c.l.b16 %v611
  %v679 = vunpack.c.h.b16 %v611
  %v680 = vunpack.c.l.b16 %v612
  %v681 = vunpack.c.h.b16 %v612
  %v682 = vunpack.c.l.b16 %v613
  %v683 = vunpack.c.h.b16 %v613
  %v684 = vunpack.c.l.b16 %v614
  %v685 = vunpack.c.h.b16 %v614
  %v686 = vunpack.c.l.b16 %v615
  %v687 = vunpack.c.h.b16 %v615
  %v688 = vunpack.c.l.b16 %v616
  %v689 = vunpack.c.h.b16 %v616
  %v690 = vunpack.c.l.b16 %v617
  %v691 = vunpack.c.h.b16 %v617
  %v692 = vunpack.c.l.b16 %v618
  %v693 = vunpack.c.h.b16 %v618
  %v694 = vunpack.c.l.b16 %v619
  %v695 = vunpack.c.h.b16 %v619
  %v696 = vunpack.c.l.b16 %v620
  %v697 = vunpack.c.h.b16 %v620
  %v698 = vunpack.c.l.b16 %v621
  %v699 = vunpack.c.h.b16 %v621
  %v700 = vunpack.c.l.b16 %v622
  %v701 = vunpack.c.h.b16 %v622
  %v702 = vunpack.c.l.b16 %v623
  %v703 = vunpack.c.h.b16 %v623
  %v704 = vunpack.c.l.b16 %v624
  %v705 = vunpack.c.h.b16 %v624
  %v706 = vunpack.c.l.b16 %v625
  %v707 = vunpack.c.h.b16 %v625
  %v708 = vunpack.c.l.b16 %v626
  %v709 = vunpack.c.h.b16 %v626
  %v710 = vpack.c.b16 %v662, %v660
  %v711 = vpack.c.b16 %v663, %v661
  %v712 = vpack.c.b16 %v666, %v664
  %v713 = vpack.c.b16 %v667, %v665
  %v714 = vpack.c.b16 %v670, %v668
  %v715 = vpack.c.b16 %v671, %v669
  %v716 = vpack.c.b16 %v674, %v672
  %v717 = vpack.c.b16 %v675, %v673
  %v718 = vpack.c.b16 %v678, %v676
  %v719 = vpack.c.b16 %v679, %v677
  %v720 = vpack.c.b16 %v682, %v680
  %v721 = vpack.c.b16 %v683, %v681
  %v722 = vpack.c.b16 %v686, %v684
  %v723 = vpack.c.b16 %v687, %v685
  %v724 = vpack.c.b16 %v690, %v688
  %v725 = vpack.c.b16 %v691, %v689
  %v726 = vpack.c.b16 %v694, %v692
  %v727 = vpack.c.b16 %v695, %v693
  %v728 = vpack.c.b16 %v698, %v696
  %v729 = vpack.c.b16 %v699, %v697
  %v730 = vpack.c.b16 %v702, %v700
  %v731 = vpack.c.b16 %v703, %v701
  %v732 = vpack.c.b16 %v706, %v704
  %v733 = vpack.c.b16 %v707, %v705
  %v734 = vpack.c.b16 %v708, %v708
  %v735 = vpack.c.b16 %v709, %v709
  %v761 = vsel %vm410, %v587, 0
  %v764 = vsel %vm410, %v589, 0
  %v767 = vsel %vm410, %v591, 0
  %v770 = vsel %vm410, %v593, 0
  %v773 = vsel %vm410, %v595, 0
  %v776 = vsel %vm410, %v597, 0
  %v779 = vsel %vm410, %v599, 0
  %v782 = vsel %vm410, %v601, 0
  %v785 = vsel %vm84, %v734, 0
  %v788 = vsel %vm84, %v735, 0
  %790 = vmatprep.subr.bf16.mxu0 %v711
  %791 = vmatpush1.bf16.msra.mxu0 %v710
  %792 = vmatprep.subr.bf16.mxu0 %v713
  %793 = vmatpush1.bf16.msra.mxu0 %v712
  %794 = vmatprep.subr.bf16.mxu0 %v715
  %795 = vmatpush1.bf16.msra.mxu0 %v714
  %796 = vmatprep.subr.bf16.mxu0 %v717
  %797 = vmatpush1.bf16.msra.mxu0 %v716
  %798 = vmatprep.subr.bf16.mxu0 %v719
  %799 = vmatpush1.bf16.msra.mxu0 %v718
  %800 = vmatprep.subr.bf16.mxu0 %v721
  %801 = vmatpush1.bf16.msra.mxu0 %v720
  %802 = vmatprep.subr.bf16.mxu0 %v723
  %803 = vmatpush1.bf16.msra.mxu0 %v722
  %804 = vmatprep.subr.bf16.mxu0 %v725
  %805 = vmatpush1.bf16.msra.mxu0 %v724
  %806 = vmatprep.subr.bf16.mxu0 %v727
  %807 = vmatpush1.bf16.msra.mxu0 %v726
  %808 = vmatprep.subr.bf16.mxu0 %v729
  %809 = vmatpush1.bf16.msra.mxu0 %v728
  %810 = vmatprep.subr.bf16.mxu0 %v731
  %811 = vmatpush1.bf16.msra.mxu0 %v730
  %812 = vmatprep.subr.bf16.mxu0 %v733
  %813 = vmatpush1.bf16.msra.mxu0 %v732
  %814 = vmatprep.subr.bf16.mxu0 %v788
  %815 = vmatpush1.bf16.msra.mxu0 %v785
  %816 = vmatprep.subr.bf16.mxu0 0
  %817 = vmatpush1.bf16.msra.mxu0 0
  %818 = vmatprep.subr.bf16.mxu0 0
  %819 = vmatpush1.bf16.msra.mxu0 0
  %820 = vmatprep.subr.bf16.mxu0 0
  %821 = vmatpush1.bf16.msra.mxu0 0
  %822 = vmatprep.mubr.bf16.mxu0 %v761
  %823 = vmatmul.mubr.bf16.gmra.mrb[0].mxu0 %v586
  %v824 = vpop.f32.mrb[0].mxu0
  %v825 = vadd.f32 %v630, %v824
  %v826 = vpop.f32.mrb[0].mxu0
  %v827 = vadd.f32 %v634, %v826
  %v828 = vpop.f32.mrb[0].mxu0
  %v829 = vadd.f32 %v630, %v828
  %v830 = vpop.f32.mrb[0].mxu0
  %v831 = vadd.f32 %v634, %v830
  %832 = vmatprep.mubr.bf16.mxu0 %v764
  %833 = vmatmul.mubr.bf16.gmra.mrb[0].mxu0 %v588
  %v834 = vpop.f32.mrb[0].mxu0
  %v835 = vadd.f32 %v630, %v834
  %v836 = vpop.f32.mrb[0].mxu0
  %v837 = vadd.f32 %v634, %v836
  %v838 = vpop.f32.mrb[0].mxu0
  %v839 = vadd.f32 %v630, %v838
  %v840 = vpop.f32.mrb[0].mxu0
  %v841 = vadd.f32 %v634, %v840
  %842 = vmatprep.mubr.bf16.mxu0 %v767
  %843 = vmatmul.mubr.bf16.gmra.mrb[0].mxu0 %v590
  %v844 = vpop.f32.mrb[0].mxu0
  %v845 = vadd.f32 %v630, %v844
  %v846 = vpop.f32.mrb[0].mxu0
  %v847 = vadd.f32 %v634, %v846
  %v848 = vpop.f32.mrb[0].mxu0
  %v849 = vadd.f32 %v630, %v848
  %v850 = vpop.f32.mrb[0].mxu0
  %v851 = vadd.f32 %v634, %v850
  %852 = vmatprep.mubr.bf16.mxu0 %v770
  %853 = vmatmul.mubr.bf16.gmra.mrb[0].mxu0 %v592
  %v854 = vpop.f32.mrb[0].mxu0
  %v855 = vadd.f32 %v630, %v854
  %v856 = vpop.f32.mrb[0].mxu0
  %v857 = vadd.f32 %v634, %v856
  %v858 = vpop.f32.mrb[0].mxu0
  %v859 = vadd.f32 %v630, %v858
  %v860 = vpop.f32.mrb[0].mxu0
  %v861 = vadd.f32 %v634, %v860
  %862 = vmatprep.mubr.bf16.mxu0 %v773
  %863 = vmatmul.mubr.bf16.gmra.mrb[0].mxu0 %v594
  %v864 = vpop.f32.mrb[0].mxu0
  %v865 = vadd.f32 %v630, %v864
  %v866 = vpop.f32.mrb[0].mxu0
  %v867 = vadd.f32 %v634, %v866
  %v868 = vpop.f32.mrb[0].mxu0
  %v869 = vadd.f32 %v630, %v868
  %v870 = vpop.f32.mrb[0].mxu0
  %v871 = vadd.f32 %v634, %v870
  %872 = vmatprep.mubr.bf16.mxu0 %v776
  %873 = vmatmul.mubr.bf16.gmra.mrb[0].mxu0 %v596
  %v874 = vpop.f32.mrb[0].mxu0
  %v875 = vadd.f32 %v630, %v874
  %v876 = vpop.f32.mrb[0].mxu0
  %v877 = vadd.f32 %v634, %v876
  %v878 = vpop.f32.mrb[0].mxu0
  %v879 = vadd.f32 %v630, %v878
  %v880 = vpop.f32.mrb[0].mxu0
  %v881 = vadd.f32 %v634, %v880
  %882 = vmatprep.mubr.bf16.mxu0 %v779
  %883 = vmatmul.mubr.bf16.gmra.mrb[0].mxu0 %v598
  %v884 = vpop.f32.mrb[0].mxu0
  %v885 = vadd.f32 %v630, %v884
  %v886 = vpop.f32.mrb[0].mxu0
  %v887 = vadd.f32 %v634, %v886
  %v888 = vpop.f32.mrb[0].mxu0
  %v889 = vadd.f32 %v630, %v888
  %v890 = vpop.f32.mrb[0].mxu0
  %v891 = vadd.f32 %v634, %v890
  %892 = vmatprep.mubr.bf16.mxu0 %v782
  %893 = vmatmul.mubr.bf16.gmra.mrb[0].mxu0 %v600
  %v894 = vpop.f32.mrb[0].mxu0
  %v895 = vadd.f32 %v630, %v894
  %v896 = vpop.f32.mrb[0].mxu0
  %v897 = vadd.f32 %v634, %v896
  %v898 = vpop.f32.mrb[0].mxu0
  %v899 = vadd.f32 %v630, %v898
  %v900 = vpop.f32.mrb[0].mxu0
  %v901 = vadd.f32 %v634, %v900
  %902 = vdwg.mxu0
  %v903 = vtanh.pop %v825
  %v904 = vtanh.pop %v827
  %v905 = vtanh.pop %v829
  %v906 = vtanh.pop %v831
  %v907 = vtanh.pop %v835
  %v908 = vtanh.pop %v837
  %v909 = vtanh.pop %v839
  %v910 = vtanh.pop %v841
  %v911 = vtanh.pop %v845
  %v912 = vtanh.pop %v847
  %v913 = vtanh.pop %v849
  %v914 = vtanh.pop %v851
  %v915 = vtanh.pop %v855
  %v916 = vtanh.pop %v857
  %v917 = vtanh.pop %v859
  %v918 = vtanh.pop %v861
  %v919 = vtanh.pop %v865
  %v920 = vtanh.pop %v867
  %v921 = vtanh.pop %v869
  %v922 = vtanh.pop %v871
  %v923 = vtanh.pop %v875
  %v924 = vtanh.pop %v877
  %v925 = vtanh.pop %v879
  %v926 = vtanh.pop %v881
  %v927 = vtanh.pop %v885
  %v928 = vtanh.pop %v887
  %v929 = vtanh.pop %v889
  %v930 = vtanh.pop %v891
  %v931 = vtanh.pop %v895
  %v932 = vtanh.pop %v897
  %v933 = vtanh.pop %v899
  %v934 = vtanh.pop %v901
  %v935 = vpack.c.bf16 %v905, %v903
  %v936 = vpack.c.bf16 %v906, %v904
  %v937 = vpack.c.bf16 %v909, %v907
  %v938 = vpack.c.bf16 %v910, %v908
  %v939 = vpack.c.bf16 %v913, %v911
  %v940 = vpack.c.bf16 %v914, %v912
  %v941 = vpack.c.bf16 %v917, %v915
  %v942 = vpack.c.bf16 %v918, %v916
  %v943 = vpack.c.bf16 %v921, %v919
  %v944 = vpack.c.bf16 %v922, %v920
  %v945 = vpack.c.bf16 %v925, %v923
  %v946 = vpack.c.bf16 %v926, %v924
  %v947 = vpack.c.bf16 %v929, %v927
  %v948 = vpack.c.bf16 %v930, %v928
  %v949 = vpack.c.bf16 %v933, %v931
  %v950 = vpack.c.bf16 %v934, %v932
  %v951 = vld [vmem:[%s2] sm:$0xf]
  %v952 = vld [vmem:[%s2 + $0x4] sm:$0xf]
  %v953 = vld [vmem:[%s2 + $0x8] sm:$0xf]
  %v954 = vld [vmem:[%s2 + $0xc] sm:$0xf]
  %v955 = vld [vmem:[%s2 + $0x10] sm:$0xf]
  %v956 = vld [vmem:[%s2 + $0x14] sm:$0xf]
  %v957 = vld [vmem:[%s2 + $0x18] sm:$0xf]
  %v958 = vld [vmem:[%s2 + $0x1c] sm:$0xf]
  %v959 = vld [vmem:[%s2 + $0x20] sm:$0xf]
  %v960 = vld [vmem:[%s2 + $0x24] sm:$0xf]
  %v961 = vld [vmem:[%s2 + $0x28] sm:$0xf]
  %v962 = vld [vmem:[%s2 + $0x2c] sm:$0xf]
  %v963 = vld [vmem:[%s2 + $0x30] sm:$0xf]
  %v964 = vld [vmem:[%s2 + $0x34] sm:$0xf]
  %v965 = vld [vmem:[%s2 + $0x38] sm:$0xf]
  %v966 = vld [vmem:[%s2 + $0x3c] sm:$0xf]
  %v967 = vld [vmem:[%s2 + $0x40] sm:$0xf]
  %v968 = vld [vmem:[%s2 + $0x44] sm:$0xf]
  %v969 = vld [vmem:[%s2 + $0x48] sm:$0xf]
  %v970 = vld [vmem:[%s2 + $0x4c] sm:$0xf]
  %v971 = vld [vmem:[%s2 + $0x50] sm:$0xf]
  %v972 = vld [vmem:[%s2 + $0x54] sm:$0xf]
  %v973 = vld [vmem:[%s2 + $0x58] sm:$0xf]
  %v974 = vld [vmem:[%s2 + $0x5c] sm:$0xf]
  %v975 = vld [vmem:[%s2 + $0x60] sm:$0xf]
  %v976 = vlaneseq
  %v977 = vshrl.u32 %v976, 7
  %v978 = vsub.s32 3, %v977
  %v979 = vrot.slane %v34, %v978
  %v1005 = vunpack.c.l.b16 %v951
  %v1006 = vunpack.c.l.b16 %v952
  %v1007 = vunpack.c.l.b16 %v953
  %v1008 = vunpack.c.l.b16 %v954
  %v1009 = vunpack.c.l.b16 %v955
  %v1010 = vunpack.c.l.b16 %v956
  %v1011 = vunpack.c.l.b16 %v957
  %v1012 = vunpack.c.l.b16 %v958
  %v1013 = vunpack.c.l.b16 %v959
  %v1014 = vunpack.c.l.b16 %v960
  %v1015 = vunpack.c.l.b16 %v961
  %v1016 = vunpack.c.l.b16 %v962
  %v1017 = vunpack.c.l.b16 %v963
  %v1018 = vunpack.c.l.b16 %v964
  %v1019 = vunpack.c.l.b16 %v965
  %v1020 = vunpack.c.l.b16 %v966
  %v1021 = vunpack.c.l.b16 %v967
  %v1022 = vunpack.c.l.b16 %v968
  %v1023 = vunpack.c.l.b16 %v969
  %v1024 = vunpack.c.l.b16 %v970
  %v1025 = vunpack.c.l.b16 %v971
  %v1026 = vunpack.c.l.b16 %v972
  %v1027 = vunpack.c.l.b16 %v973
  %v1028 = vunpack.c.l.b16 %v974
  %v1029 = vunpack.c.l.b16 %v975
  %v1030 = vpack.c.b16 %v1006, %v1005
  %v1031 = vpack.c.b16 %v1008, %v1007
  %v1032 = vpack.c.b16 %v1010, %v1009
  %v1033 = vpack.c.b16 %v1012, %v1011
  %v1034 = vpack.c.b16 %v1014, %v1013
  %v1035 = vpack.c.b16 %v1016, %v1015
  %v1036 = vpack.c.b16 %v1018, %v1017
  %v1037 = vpack.c.b16 %v1020, %v1019
  %v1038 = vpack.c.b16 %v1022, %v1021
  %v1039 = vpack.c.b16 %v1024, %v1023
  %v1040 = vpack.c.b16 %v1026, %v1025
  %v1041 = vpack.c.b16 %v1028, %v1027
  %v1042 = vpack.c.b16 %v1029, %v1029
  %v1056 = vsel %vm410, %v936, 0
  %v1059 = vsel %vm410, %v938, 0
  %v1062 = vsel %vm410, %v940, 0
  %v1065 = vsel %vm410, %v942, 0
  %v1068 = vsel %vm410, %v944, 0
  %v1071 = vsel %vm410, %v946, 0
  %v1074 = vsel %vm410, %v948, 0
  %v1077 = vsel %vm410, %v950, 0
  %v1080 = vsel %vm84, %v1042, 0
  %1082 = vmatprep.subr.bf16.mxu0 0
  %1083 = vmatpush1.bf16.msra.mxu0 %v1030
  %1084 = vmatprep.subr.bf16.mxu0 0
  %1085 = vmatpush1.bf16.msra.mxu0 %v1031
  %1086 = vmatprep.subr.bf16.mxu0 0
  %1087 = vmatpush1.bf16.msra.mxu0 %v1032
  %1088 = vmatprep.subr.bf16.mxu0 0
  %1089 = vmatpush1.bf16.msra.mxu0 %v1033
  %1090 = vmatprep.subr.bf16.mxu0 0
  %1091 = vmatpush1.bf16.msra.mxu0 %v1034
  %1092 = vmatprep.subr.bf16.mxu0 0
  %1093 = vmatpush1.bf16.msra.mxu0 %v1035
  %1094 = vmatprep.subr.bf16.mxu0 0
  %1095 = vmatpush1.bf16.msra.mxu0 %v1036
  %1096 = vmatprep.subr.bf16.mxu0 0
  %1097 = vmatpush1.bf16.msra.mxu0 %v1037
  %1098 = vmatprep.subr.bf16.mxu0 0
  %1099 = vmatpush1.bf16.msra.mxu0 %v1038
  %1100 = vmatprep.subr.bf16.mxu0 0
  %1101 = vmatpush1.bf16.msra.mxu0 %v1039
  %1102 = vmatprep.subr.bf16.mxu0 0
  %1103 = vmatpush1.bf16.msra.mxu0 %v1040
  %1104 = vmatprep.subr.bf16.mxu0 0
  %1105 = vmatpush1.bf16.msra.mxu0 %v1041
  %1106 = vmatprep.subr.bf16.mxu0 0
  %1107 = vmatpush1.bf16.msra.mxu0 %v1080
  %1108 = vmatprep.subr.bf16.mxu0 0
  %1109 = vmatpush1.bf16.msra.mxu0 0
  %1110 = vmatprep.subr.bf16.mxu0 0
  %1111 = vmatpush1.bf16.msra.mxu0 0
  %1112 = vmatprep.subr.bf16.mxu0 0
  %1113 = vmatpush1.bf16.msra.mxu0 0
  %1114 = vmatprep.mubr.bf16.mxu0 %v1056
  %1115 = vmatmul.mubr.bf16.gmra.mrb[0].mxu0 %v935
  %v1116 = vpop.f32.mrb[0].mxu0
  %v1117 = vadd.f32 %v979, %v1116
  %v1118 = vpop.f32.mrb[0].mxu0
  %v1119 = vpop.f32.mrb[0].mxu0
  %v1120 = vadd.f32 %v979, %v1119
  %v1121 = vpop.f32.mrb[0].mxu0
  %1122 = vmatprep.mubr.bf16.mxu0 %v1059
  %1123 = vmatmul.mubr.bf16.gmra.mrb[0].mxu0 %v937
  %v1124 = vpop.f32.mrb[0].mxu0
  %v1125 = vadd.f32 %v979, %v1124
  %v1126 = vpop.f32.mrb[0].mxu0
  %v1127 = vpop.f32.mrb[0].mxu0
  %v1128 = vadd.f32 %v979, %v1127
  %v1129 = vpop.f32.mrb[0].mxu0
  %1130 = vmatprep.mubr.bf16.mxu0 %v1062
  %1131 = vmatmul.mubr.bf16.gmra.mrb[0].mxu0 %v939
  %v1132 = vpop.f32.mrb[0].mxu0
  %v1133 = vadd.f32 %v979, %v1132
  %v1134 = vpop.f32.mrb[0].mxu0
  %v1135 = vpop.f32.mrb[0].mxu0
  %v1136 = vadd.f32 %v979, %v1135
  %v1137 = vpop.f32.mrb[0].mxu0
  %1138 = vmatprep.mubr.bf16.mxu0 %v1065
  %1139 = vmatmul.mubr.bf16.gmra.mrb[0].mxu0 %v941
  %v1140 = vpop.f32.mrb[0].mxu0
  %v1141 = vadd.f32 %v979, %v1140
  %v1142 = vpop.f32.mrb[0].mxu0
  %v1143 = vpop.f32.mrb[0].mxu0
  %v1144 = vadd.f32 %v979, %v1143
  %v1145 = vpop.f32.mrb[0].mxu0
  %1146 = vmatprep.mubr.bf16.mxu0 %v1068
  %1147 = vmatmul.mubr.bf16.gmra.mrb[0].mxu0 %v943
  %v1148 = vpop.f32.mrb[0].mxu0
  %v1149 = vadd.f32 %v979, %v1148
  %v1150 = vpop.f32.mrb[0].mxu0
  %v1151 = vpop.f32.mrb[0].mxu0
  %v1152 = vadd.f32 %v979, %v1151
  %v1153 = vpop.f32.mrb[0].mxu0
  %1154 = vmatprep.mubr.bf16.mxu0 %v1071
  %1155 = vmatmul.mubr.bf16.gmra.mrb[0].mxu0 %v945
  %v1156 = vpop.f32.mrb[0].mxu0
  %v1157 = vadd.f32 %v979, %v1156
  %v1158 = vpop.f32.mrb[0].mxu0
  %v1159 = vpop.f32.mrb[0].mxu0
  %v1160 = vadd.f32 %v979, %v1159
  %v1161 = vpop.f32.mrb[0].mxu0
  %1162 = vmatprep.mubr.bf16.mxu0 %v1074
  %1163 = vmatmul.mubr.bf16.gmra.mrb[0].mxu0 %v947
  %v1164 = vpop.f32.mrb[0].mxu0
  %v1165 = vadd.f32 %v979, %v1164
  %v1166 = vpop.f32.mrb[0].mxu0
  %v1167 = vpop.f32.mrb[0].mxu0
  %v1168 = vadd.f32 %v979, %v1167
  %v1169 = vpop.f32.mrb[0].mxu0
  %1170 = vmatprep.mubr.bf16.mxu0 %v1077
  %1171 = vmatmul.mubr.bf16.gmra.mrb[0].mxu0 %v949
  %v1172 = vpop.f32.mrb[0].mxu0
  %v1173 = vadd.f32 %v979, %v1172
  %v1174 = vpop.f32.mrb[0].mxu0
  %v1175 = vpop.f32.mrb[0].mxu0
  %v1176 = vadd.f32 %v979, %v1175
  %v1177 = vpop.f32.mrb[0].mxu0
  %1178 = vdwg.mxu0
  %v1179 = vtanh.pop %v1117
  %v1180 = vtanh.pop %v1120
  %v1181 = vtanh.pop %v1125
  %v1182 = vtanh.pop %v1128
  %v1183 = vtanh.pop %v1133
  %v1184 = vtanh.pop %v1136
  %v1185 = vtanh.pop %v1141
  %v1186 = vtanh.pop %v1144
  %v1187 = vtanh.pop %v1149
  %v1188 = vtanh.pop %v1152
  %v1189 = vtanh.pop %v1157
  %v1190 = vtanh.pop %v1160
  %v1191 = vtanh.pop %v1165
  %v1192 = vtanh.pop %v1168
  %v1193 = vtanh.pop %v1173
  %v1194 = vtanh.pop %v1176
  %v1195 = vlaneseq
  %v1196 = vshrl.u32 %v1195, 7
  %v1197 = vsub.s32 0, %v1196
  %v1198 = vrot.slane %v36, %v1197
  %v1199 = vmul.f32 %v1179, %v1198
  %v1200 = vmul.f32 %v1180, %v1198
  %v1201 = vmul.f32 %v1181, %v1198
  %v1202 = vmul.f32 %v1182, %v1198
  %v1203 = vmul.f32 %v1183, %v1198
  %v1204 = vmul.f32 %v1184, %v1198
  %v1205 = vmul.f32 %v1185, %v1198
  %v1206 = vmul.f32 %v1186, %v1198
  %v1207 = vmul.f32 %v1187, %v1198
  %v1208 = vmul.f32 %v1188, %v1198
  %v1209 = vmul.f32 %v1189, %v1198
  %v1210 = vmul.f32 %v1190, %v1198
  %v1211 = vmul.f32 %v1191, %v1198
  %v1212 = vmul.f32 %v1192, %v1198
  %v1213 = vmul.f32 %v1193, %v1198
  %v1214 = vmul.f32 %v1194, %v1198
  %vm1215 = vcmask 818176
  %v1216 = vsel %vm1215, %v1199, 0.0
  %1217 = vadd.xlane.f32.xlu0 %v1216
  %v1218 = vpop.xlane.xlu0 %1217
  %v1219 = vsel %vm1215, %v1200, 0.0
  %1220 = vadd.xlane.f32.xlu0 %v1219
  %v1221 = vpop.xlane.xlu0 %1220
  %v1222 = vsel %vm1215, %v1201, 0.0
  %1223 = vadd.xlane.f32.xlu0 %v1222
  %v1224 = vpop.xlane.xlu0 %1223
  %v1225 = vsel %vm1215, %v1202, 0.0
  %1226 = vadd.xlane.f32.xlu0 %v1225
  %v1227 = vpop.xlane.xlu0 %1226
  %v1228 = vsel %vm1215, %v1203, 0.0
  %1229 = vadd.xlane.f32.xlu0 %v1228
  %v1230 = vpop.xlane.xlu0 %1229
  %v1231 = vsel %vm1215, %v1204, 0.0
  %1232 = vadd.xlane.f32.xlu0 %v1231
  %v1233 = vpop.xlane.xlu0 %1232
  %v1234 = vsel %vm1215, %v1205, 0.0
  %1235 = vadd.xlane.f32.xlu0 %v1234
  %v1236 = vpop.xlane.xlu0 %1235
  %v1237 = vsel %vm1215, %v1206, 0.0
  %1238 = vadd.xlane.f32.xlu0 %v1237
  %v1239 = vpop.xlane.xlu0 %1238
  %v1240 = vsel %vm1215, %v1207, 0.0
  %1241 = vadd.xlane.f32.xlu0 %v1240
  %v1242 = vpop.xlane.xlu0 %1241
  %v1243 = vsel %vm1215, %v1208, 0.0
  %1244 = vadd.xlane.f32.xlu0 %v1243
  %v1245 = vpop.xlane.xlu0 %1244
  %v1246 = vsel %vm1215, %v1209, 0.0
  %1247 = vadd.xlane.f32.xlu0 %v1246
  %v1248 = vpop.xlane.xlu0 %1247
  %v1249 = vsel %vm1215, %v1210, 0.0
  %1250 = vadd.xlane.f32.xlu0 %v1249
  %v1251 = vpop.xlane.xlu0 %1250
  %v1252 = vsel %vm1215, %v1211, 0.0
  %1253 = vadd.xlane.f32.xlu0 %v1252
  %v1254 = vpop.xlane.xlu0 %1253
  %v1255 = vsel %vm1215, %v1212, 0.0
  %1256 = vadd.xlane.f32.xlu0 %v1255
  %v1257 = vpop.xlane.xlu0 %1256
  %v1258 = vsel %vm1215, %v1213, 0.0
  %1259 = vadd.xlane.f32.xlu0 %v1258
  %v1260 = vpop.xlane.xlu0 %1259
  %v1261 = vsel %vm1215, %v1214, 0.0
  %1262 = vadd.xlane.f32.xlu0 %v1261
  %v1263 = vpop.xlane.xlu0 %1262
  %v1264 = vlaneseq
  %v1265 = vshrl.u32 %v1264, 7
  %v1266 = vsub.s32 4, %v1265
  %v1267 = vrot.slane %v34, %v1266
  %v1268 = vadd.f32 %v1218, %v1267
  %v1269 = vadd.f32 %v1221, %v1267
  %v1270 = vadd.f32 %v1224, %v1267
  %v1271 = vadd.f32 %v1227, %v1267
  %v1272 = vadd.f32 %v1230, %v1267
  %v1273 = vadd.f32 %v1233, %v1267
  %v1274 = vadd.f32 %v1236, %v1267
  %v1275 = vadd.f32 %v1239, %v1267
  %v1276 = vadd.f32 %v1242, %v1267
  %v1277 = vadd.f32 %v1245, %v1267
  %v1278 = vadd.f32 %v1248, %v1267
  %v1279 = vadd.f32 %v1251, %v1267
  %v1280 = vadd.f32 %v1254, %v1267
  %v1281 = vadd.f32 %v1257, %v1267
  %v1282 = vadd.f32 %v1260, %v1267
  %v1283 = vadd.f32 %v1263, %v1267
  %1285 = vset.pattern.permute.xlu0 0
  %1286 = vperm.xlu0 %1285, %v1268
  %v1287 = vpop.permute.xlu0 %1286
  %1290 = vset.pattern.permute.xlu0 0
  %1291 = vperm.xlu0 %1290, %v1269
  %v1292 = vpop.permute.xlu0 %1291
  %1295 = vset.pattern.permute.xlu0 0
  %1296 = vperm.xlu0 %1295, %v1270
  %v1297 = vpop.permute.xlu0 %1296
  %1300 = vset.pattern.permute.xlu0 0
  %1301 = vperm.xlu0 %1300, %v1271
  %v1302 = vpop.permute.xlu0 %1301
  %1305 = vset.pattern.permute.xlu0 0
  %1306 = vperm.xlu0 %1305, %v1272
  %v1307 = vpop.permute.xlu0 %1306
  %1310 = vset.pattern.permute.xlu0 0
  %1311 = vperm.xlu0 %1310, %v1273
  %v1312 = vpop.permute.xlu0 %1311
  %1315 = vset.pattern.permute.xlu0 0
  %1316 = vperm.xlu0 %1315, %v1274
  %v1317 = vpop.permute.xlu0 %1316
  %1320 = vset.pattern.permute.xlu0 0
  %1321 = vperm.xlu0 %1320, %v1275
  %v1322 = vpop.permute.xlu0 %1321
  %1325 = vset.pattern.permute.xlu0 0
  %1326 = vperm.xlu0 %1325, %v1276
  %v1327 = vpop.permute.xlu0 %1326
  %1330 = vset.pattern.permute.xlu0 0
  %1331 = vperm.xlu0 %1330, %v1277
  %v1332 = vpop.permute.xlu0 %1331
  %1335 = vset.pattern.permute.xlu0 0
  %1336 = vperm.xlu0 %1335, %v1278
  %v1337 = vpop.permute.xlu0 %1336
  %1340 = vset.pattern.permute.xlu0 0
  %1341 = vperm.xlu0 %1340, %v1279
  %v1342 = vpop.permute.xlu0 %1341
  %1345 = vset.pattern.permute.xlu0 0
  %1346 = vperm.xlu0 %1345, %v1280
  %v1347 = vpop.permute.xlu0 %1346
  %1350 = vset.pattern.permute.xlu0 0
  %1351 = vperm.xlu0 %1350, %v1281
  %v1352 = vpop.permute.xlu0 %1351
  %1355 = vset.pattern.permute.xlu0 0
  %1356 = vperm.xlu0 %1355, %v1282
  %v1357 = vpop.permute.xlu0 %1356
  %1360 = vset.pattern.permute.xlu0 0
  %1361 = vperm.xlu0 %1360, %v1283
  %v1362 = vpop.permute.xlu0 %1361
  %v1364 = vlaneseq
  %v1365 = vshrl.u32 %v1364, 7
  %v1366 = vsub.s32 2, %v1365
  %v1367 = vrot.slane %v36, %v1366
  %v1368 = vmul.f32 %v1287, %v1367
  %v1369 = vmul.f32 %v1292, %v1367
  %v1370 = vmul.f32 %v1297, %v1367
  %v1371 = vmul.f32 %v1302, %v1367
  %v1372 = vmul.f32 %v1307, %v1367
  %v1373 = vmul.f32 %v1312, %v1367
  %v1374 = vmul.f32 %v1317, %v1367
  %v1375 = vmul.f32 %v1322, %v1367
  %v1376 = vmul.f32 %v1327, %v1367
  %v1377 = vmul.f32 %v1332, %v1367
  %v1378 = vmul.f32 %v1337, %v1367
  %v1379 = vmul.f32 %v1342, %v1367
  %v1380 = vmul.f32 %v1347, %v1367
  %v1381 = vmul.f32 %v1352, %v1367
  %v1382 = vmul.f32 %v1357, %v1367
  %v1383 = vmul.f32 %v1362, %v1367
  %1385 = vset.pattern.permute.xlu0 6
  %1386 = vperm.xlu0 %1385, %v18
  %v1387 = vpop.permute.xlu0 %1386
  %1390 = vset.pattern.permute.xlu0 6
  %1391 = vperm.xlu0 %1390, %v19
  %v1392 = vpop.permute.xlu0 %1391
  %1395 = vset.pattern.permute.xlu0 6
  %1396 = vperm.xlu0 %1395, %v20
  %v1397 = vpop.permute.xlu0 %1396
  %1400 = vset.pattern.permute.xlu0 6
  %1401 = vperm.xlu0 %1400, %v21
  %v1402 = vpop.permute.xlu0 %1401
  %1405 = vset.pattern.permute.xlu0 6
  %1406 = vperm.xlu0 %1405, %v22
  %v1407 = vpop.permute.xlu0 %1406
  %1410 = vset.pattern.permute.xlu0 6
  %1411 = vperm.xlu0 %1410, %v23
  %v1412 = vpop.permute.xlu0 %1411
  %1415 = vset.pattern.permute.xlu0 6
  %1416 = vperm.xlu0 %1415, %v24
  %v1417 = vpop.permute.xlu0 %1416
  %1420 = vset.pattern.permute.xlu0 6
  %1421 = vperm.xlu0 %1420, %v25
  %v1422 = vpop.permute.xlu0 %1421
  %1425 = vset.pattern.permute.xlu0 6
  %1426 = vperm.xlu0 %1425, %v26
  %v1427 = vpop.permute.xlu0 %1426
  %1430 = vset.pattern.permute.xlu0 6
  %1431 = vperm.xlu0 %1430, %v27
  %v1432 = vpop.permute.xlu0 %1431
  %1435 = vset.pattern.permute.xlu0 6
  %1436 = vperm.xlu0 %1435, %v28
  %v1437 = vpop.permute.xlu0 %1436
  %1440 = vset.pattern.permute.xlu0 6
  %1441 = vperm.xlu0 %1440, %v29
  %v1442 = vpop.permute.xlu0 %1441
  %1445 = vset.pattern.permute.xlu0 6
  %1446 = vperm.xlu0 %1445, %v30
  %v1447 = vpop.permute.xlu0 %1446
  %1450 = vset.pattern.permute.xlu0 6
  %1451 = vperm.xlu0 %1450, %v31
  %v1452 = vpop.permute.xlu0 %1451
  %1455 = vset.pattern.permute.xlu0 6
  %1456 = vperm.xlu0 %1455, %v32
  %v1457 = vpop.permute.xlu0 %1456
  %1460 = vset.pattern.permute.xlu0 6
  %1461 = vperm.xlu0 %1460, %v33
  %v1462 = vpop.permute.xlu0 %1461
  %v1464 = vlaneseq
  %v1465 = vshrl.u32 %v1464, 7
  %v1466 = vsub.s32 3, %v1465
  %v1467 = vrot.slane %v36, %v1466
  %v1468 = vmul.f32 %v1387, %v1467
  %v1469 = vmul.f32 %v1392, %v1467
  %v1470 = vmul.f32 %v1397, %v1467
  %v1471 = vmul.f32 %v1402, %v1467
  %v1472 = vmul.f32 %v1407, %v1467
  %v1473 = vmul.f32 %v1412, %v1467
  %v1474 = vmul.f32 %v1417, %v1467
  %v1475 = vmul.f32 %v1422, %v1467
  %v1476 = vmul.f32 %v1427, %v1467
  %v1477 = vmul.f32 %v1432, %v1467
  %v1478 = vmul.f32 %v1437, %v1467
  %v1479 = vmul.f32 %v1442, %v1467
  %v1480 = vmul.f32 %v1447, %v1467
  %v1481 = vmul.f32 %v1452, %v1467
  %v1482 = vmul.f32 %v1457, %v1467
  %v1483 = vmul.f32 %v1462, %v1467
  %v1484 = vadd.f32 %v1368, %v1468
  %v1485 = vadd.f32 %v1369, %v1469
  %v1486 = vadd.f32 %v1370, %v1470
  %v1487 = vadd.f32 %v1371, %v1471
  %v1488 = vadd.f32 %v1372, %v1472
  %v1489 = vadd.f32 %v1373, %v1473
  %v1490 = vadd.f32 %v1374, %v1474
  %v1491 = vadd.f32 %v1375, %v1475
  %v1492 = vadd.f32 %v1376, %v1476
  %v1493 = vadd.f32 %v1377, %v1477
  %v1494 = vadd.f32 %v1378, %v1478
  %v1495 = vadd.f32 %v1379, %v1479
  %v1496 = vadd.f32 %v1380, %v1480
  %v1497 = vadd.f32 %v1381, %v1481
  %v1498 = vadd.f32 %v1382, %v1482
  %v1499 = vadd.f32 %v1383, %v1483
  %v1500 = vlaneseq
  %v1501 = vshrl.u32 %v1500, 7
  %v1502 = vsub.s32 5, %v1501
  %v1503 = vrot.slane %v34, %v1502
  %v1504 = vadd.f32 %v1484, %v1503
  %v1505 = vadd.f32 %v1485, %v1503
  %v1506 = vadd.f32 %v1486, %v1503
  %v1507 = vadd.f32 %v1487, %v1503
  %v1508 = vadd.f32 %v1488, %v1503
  %v1509 = vadd.f32 %v1489, %v1503
  %v1510 = vadd.f32 %v1490, %v1503
  %v1511 = vadd.f32 %v1491, %v1503
  %v1512 = vadd.f32 %v1492, %v1503
  %v1513 = vadd.f32 %v1493, %v1503
  %v1514 = vadd.f32 %v1494, %v1503
  %v1515 = vadd.f32 %v1495, %v1503
  %v1516 = vadd.f32 %v1496, %v1503
  %v1517 = vadd.f32 %v1497, %v1503
  %v1518 = vadd.f32 %v1498, %v1503
  %v1519 = vadd.f32 %v1499, %v1503
  %v1520 = vmul.f32 %v1504, 0.5
  %v1521 = vmul.f32 %v1505, 0.5
  %v1522 = vmul.f32 %v1506, 0.5
  %v1523 = vmul.f32 %v1507, 0.5
  %v1524 = vmul.f32 %v1508, 0.5
  %v1525 = vmul.f32 %v1509, 0.5
  %v1526 = vmul.f32 %v1510, 0.5
  %v1527 = vmul.f32 %v1511, 0.5
  %v1528 = vmul.f32 %v1512, 0.5
  %v1529 = vmul.f32 %v1513, 0.5
  %v1530 = vmul.f32 %v1514, 0.5
  %v1531 = vmul.f32 %v1515, 0.5
  %v1532 = vmul.f32 %v1516, 0.5
  %v1533 = vmul.f32 %v1517, 0.5
  %v1534 = vmul.f32 %v1518, 0.5
  %v1535 = vmul.f32 %v1519, 0.5
  %v1536 = vtanh.pop %v1520
  %v1537 = vtanh.pop %v1521
  %v1538 = vtanh.pop %v1522
  %v1539 = vtanh.pop %v1523
  %v1540 = vtanh.pop %v1524
  %v1541 = vtanh.pop %v1525
  %v1542 = vtanh.pop %v1526
  %v1543 = vtanh.pop %v1527
  %v1544 = vtanh.pop %v1528
  %v1545 = vtanh.pop %v1529
  %v1546 = vtanh.pop %v1530
  %v1547 = vtanh.pop %v1531
  %v1548 = vtanh.pop %v1532
  %v1549 = vtanh.pop %v1533
  %v1550 = vtanh.pop %v1534
  %v1551 = vtanh.pop %v1535
  %v1552 = vadd.f32 %v1536, 1.0
  %v1553 = vadd.f32 %v1537, 1.0
  %v1554 = vadd.f32 %v1538, 1.0
  %v1555 = vadd.f32 %v1539, 1.0
  %v1556 = vadd.f32 %v1540, 1.0
  %v1557 = vadd.f32 %v1541, 1.0
  %v1558 = vadd.f32 %v1542, 1.0
  %v1559 = vadd.f32 %v1543, 1.0
  %v1560 = vadd.f32 %v1544, 1.0
  %v1561 = vadd.f32 %v1545, 1.0
  %v1562 = vadd.f32 %v1546, 1.0
  %v1563 = vadd.f32 %v1547, 1.0
  %v1564 = vadd.f32 %v1548, 1.0
  %v1565 = vadd.f32 %v1549, 1.0
  %v1566 = vadd.f32 %v1550, 1.0
  %v1567 = vadd.f32 %v1551, 1.0
  %v1568 = vmul.f32 %v1552, 0.5
  %v1569 = vmul.f32 %v1553, 0.5
  %v1570 = vmul.f32 %v1554, 0.5
  %v1571 = vmul.f32 %v1555, 0.5
  %v1572 = vmul.f32 %v1556, 0.5
  %v1573 = vmul.f32 %v1557, 0.5
  %v1574 = vmul.f32 %v1558, 0.5
  %v1575 = vmul.f32 %v1559, 0.5
  %v1576 = vmul.f32 %v1560, 0.5
  %v1577 = vmul.f32 %v1561, 0.5
  %v1578 = vmul.f32 %v1562, 0.5
  %v1579 = vmul.f32 %v1563, 0.5
  %v1580 = vmul.f32 %v1564, 0.5
  %v1581 = vmul.f32 %v1565, 0.5
  %v1582 = vmul.f32 %v1566, 0.5
  %v1583 = vmul.f32 %v1567, 0.5
  %v1584 = vpack.c.bf16 %v1569, %v1568
  %v1585 = vpack.c.bf16 %v1571, %v1570
  %v1586 = vpack.c.bf16 %v1573, %v1572
  %v1587 = vpack.c.bf16 %v1575, %v1574
  %v1588 = vpack.c.bf16 %v1577, %v1576
  %v1589 = vpack.c.bf16 %v1579, %v1578
  %v1590 = vpack.c.bf16 %v1581, %v1580
  %v1591 = vpack.c.bf16 %v1583, %v1582
  %v1592 = vld [vmem:[%s2 + $0x68] sm:$0xf]
  %v1593 = vld [vmem:[%s2 + $0x6c] sm:$0xf]
  %v1594 = vld [vmem:[%s2 + $0x70] sm:$0xf]
  %v1595 = vld [vmem:[%s2 + $0x74] sm:$0xf]
  %v1596 = vld [vmem:[%s2 + $0x78] sm:$0xf]
  %v1597 = vld [vmem:[%s2 + $0x7c] sm:$0xf]
  %v1598 = vld [vmem:[%s2 + $0x80] sm:$0xf]
  %v1599 = vld [vmem:[%s2 + $0x84] sm:$0xf]
  %v1600 = vld [vmem:[%s2 + $0x88] sm:$0xf]
  %v1601 = vld [vmem:[%s2 + $0x8c] sm:$0xf]
  %v1602 = vld [vmem:[%s2 + $0x90] sm:$0xf]
  %v1603 = vld [vmem:[%s2 + $0x94] sm:$0xf]
  %v1604 = vld [vmem:[%s2 + $0x98] sm:$0x3]
  %v1605 = vlaneseq
  %v1606 = vshrl.u32 %v1605, 7
  %v1607 = vsub.s32 6, %v1606
  %v1608 = vrot.slane %v34, %v1607
  %v1622 = vunpack.c.l.b16 %v1592
  %v1623 = vunpack.c.l.b16 %v1593
  %v1624 = vunpack.c.l.b16 %v1594
  %v1625 = vunpack.c.l.b16 %v1595
  %v1626 = vunpack.c.l.b16 %v1596
  %v1627 = vunpack.c.l.b16 %v1597
  %v1628 = vunpack.c.l.b16 %v1598
  %v1629 = vunpack.c.l.b16 %v1599
  %v1630 = vunpack.c.l.b16 %v1600
  %v1631 = vunpack.c.l.b16 %v1601
  %v1632 = vunpack.c.l.b16 %v1602
  %v1633 = vunpack.c.l.b16 %v1603
  %v1634 = vunpack.c.l.b16 %v1604
  %v1635 = vpack.c.b16 %v1623, %v1622
  %v1636 = vpack.c.b16 %v1625, %v1624
  %v1637 = vpack.c.b16 %v1627, %v1626
  %v1638 = vpack.c.b16 %v1629, %v1628
  %v1639 = vpack.c.b16 %v1631, %v1630
  %v1640 = vpack.c.b16 %v1633, %v1632
  %v1641 = vpack.c.b16 %v1634, %v1634
  %v1649 = vsel %vm1215, %v1584, 0
  %v1652 = vsel %vm1215, %v1585, 0
  %v1655 = vsel %vm1215, %v1586, 0
  %v1658 = vsel %vm1215, %v1587, 0
  %v1661 = vsel %vm1215, %v1588, 0
  %v1664 = vsel %vm1215, %v1589, 0
  %v1667 = vsel %vm1215, %v1590, 0
  %v1670 = vsel %vm1215, %v1591, 0
  %vm1672 = vcmask 1041408
  %v1674 = vsel %vm1672, %v1641, 0
  %1676 = vmatprep.subr.bf16.mxu0 0
  %1677 = vmatpush1.bf16.msra.mxu0 %v1635
  %1678 = vmatprep.subr.bf16.mxu0 0
  %1679 = vmatpush1.bf16.msra.mxu0 %v1636
  %1680 = vmatprep.subr.bf16.mxu0 0
  %1681 = vmatpush1.bf16.msra.mxu0 %v1637
  %1682 = vmatprep.subr.bf16.mxu0 0
  %1683 = vmatpush1.bf16.msra.mxu0 %v1638
  %1684 = vmatprep.subr.bf16.mxu0 0
  %1685 = vmatpush1.bf16.msra.mxu0 %v1639
  %1686 = vmatprep.subr.bf16.mxu0 0
  %1687 = vmatpush1.bf16.msra.mxu0 %v1640
  %1688 = vmatprep.subr.bf16.mxu0 0
  %1689 = vmatpush1.bf16.msra.mxu0 %v1674
  %1690 = vmatprep.subr.bf16.mxu0 0
  %1691 = vmatpush1.bf16.msra.mxu0 0
  %1692 = vmatprep.subr.bf16.mxu0 0
  %1693 = vmatpush1.bf16.msra.mxu0 0
  %1694 = vmatprep.subr.bf16.mxu0 0
  %1695 = vmatpush1.bf16.msra.mxu0 0
  %1696 = vmatprep.subr.bf16.mxu0 0
  %1697 = vmatpush1.bf16.msra.mxu0 0
  %1698 = vmatprep.subr.bf16.mxu0 0
  %1699 = vmatpush1.bf16.msra.mxu0 0
  %1700 = vmatprep.subr.bf16.mxu0 0
  %1701 = vmatpush1.bf16.msra.mxu0 0
  %1702 = vmatprep.subr.bf16.mxu0 0
  %1703 = vmatpush1.bf16.msra.mxu0 0
  %1704 = vmatprep.subr.bf16.mxu0 0
  %1705 = vmatpush1.bf16.msra.mxu0 0
  %1706 = vmatprep.subr.bf16.mxu0 0
  %1707 = vmatpush1.bf16.msra.mxu0 0
  %1708 = vmatprep.mubr.bf16.mxu0 0
  %1709 = vmatmul.mubr.bf16.gmra.mrb[0].mxu0 %v1649
  %v1710 = vpop.f32.mrb[0].mxu0
  %v1711 = vadd.f32 %v1608, %v1710
  %v1712 = vpop.f32.mrb[0].mxu0
  %v1713 = vpop.f32.mrb[0].mxu0
  %v1714 = vadd.f32 %v1608, %v1713
  %v1715 = vpop.f32.mrb[0].mxu0
  %1716 = vmatprep.mubr.bf16.mxu0 0
  %1717 = vmatmul.mubr.bf16.gmra.mrb[0].mxu0 %v1652
  %v1718 = vpop.f32.mrb[0].mxu0
  %v1719 = vadd.f32 %v1608, %v1718
  %v1720 = vpop.f32.mrb[0].mxu0
  %v1721 = vpop.f32.mrb[0].mxu0
  %v1722 = vadd.f32 %v1608, %v1721
  %v1723 = vpop.f32.mrb[0].mxu0
  %1724 = vmatprep.mubr.bf16.mxu0 0
  %1725 = vmatmul.mubr.bf16.gmra.mrb[0].mxu0 %v1655
  %v1726 = vpop.f32.mrb[0].mxu0
  %v1727 = vadd.f32 %v1608, %v1726
  %v1728 = vpop.f32.mrb[0].mxu0
  %v1729 = vpop.f32.mrb[0].mxu0
  %v1730 = vadd.f32 %v1608, %v1729
  %v1731 = vpop.f32.mrb[0].mxu0
  %1732 = vmatprep.mubr.bf16.mxu0 0
  %1733 = vmatmul.mubr.bf16.gmra.mrb[0].mxu0 %v1658
  %v1734 = vpop.f32.mrb[0].mxu0
  %v1735 = vadd.f32 %v1608, %v1734
  %v1736 = vpop.f32.mrb[0].mxu0
  %v1737 = vpop.f32.mrb[0].mxu0
  %v1738 = vadd.f32 %v1608, %v1737
  %v1739 = vpop.f32.mrb[0].mxu0
  %1740 = vmatprep.mubr.bf16.mxu0 0
  %1741 = vmatmul.mubr.bf16.gmra.mrb[0].mxu0 %v1661
  %v1742 = vpop.f32.mrb[0].mxu0
  %v1743 = vadd.f32 %v1608, %v1742
  %v1744 = vpop.f32.mrb[0].mxu0
  %v1745 = vpop.f32.mrb[0].mxu0
  %v1746 = vadd.f32 %v1608, %v1745
  %v1747 = vpop.f32.mrb[0].mxu0
  %1748 = vmatprep.mubr.bf16.mxu0 0
  %1749 = vmatmul.mubr.bf16.gmra.mrb[0].mxu0 %v1664
  %v1750 = vpop.f32.mrb[0].mxu0
  %v1751 = vadd.f32 %v1608, %v1750
  %v1752 = vpop.f32.mrb[0].mxu0
  %v1753 = vpop.f32.mrb[0].mxu0
  %v1754 = vadd.f32 %v1608, %v1753
  %v1755 = vpop.f32.mrb[0].mxu0
  %1756 = vmatprep.mubr.bf16.mxu0 0
  %1757 = vmatmul.mubr.bf16.gmra.mrb[0].mxu0 %v1667
  %v1758 = vpop.f32.mrb[0].mxu0
  %v1759 = vadd.f32 %v1608, %v1758
  %v1760 = vpop.f32.mrb[0].mxu0
  %v1761 = vpop.f32.mrb[0].mxu0
  %v1762 = vadd.f32 %v1608, %v1761
  %v1763 = vpop.f32.mrb[0].mxu0
  %1764 = vmatprep.mubr.bf16.mxu0 0
  %1765 = vmatmul.mubr.bf16.gmra.mrb[0].mxu0 %v1670
  %v1766 = vpop.f32.mrb[0].mxu0
  %v1767 = vadd.f32 %v1608, %v1766
  %v1768 = vpop.f32.mrb[0].mxu0
  %v1769 = vpop.f32.mrb[0].mxu0
  %v1770 = vadd.f32 %v1608, %v1769
  %v1771 = vpop.f32.mrb[0].mxu0
  %1772 = vdwg.mxu0
  %v1773 = vmul.f32 %v1711, 0.5
  %v1774 = vmul.f32 %v1714, 0.5
  %v1775 = vmul.f32 %v1719, 0.5
  %v1776 = vmul.f32 %v1722, 0.5
  %v1777 = vmul.f32 %v1727, 0.5
  %v1778 = vmul.f32 %v1730, 0.5
  %v1779 = vmul.f32 %v1735, 0.5
  %v1780 = vmul.f32 %v1738, 0.5
  %v1781 = vmul.f32 %v1743, 0.5
  %v1782 = vmul.f32 %v1746, 0.5
  %v1783 = vmul.f32 %v1751, 0.5
  %v1784 = vmul.f32 %v1754, 0.5
  %v1785 = vmul.f32 %v1759, 0.5
  %v1786 = vmul.f32 %v1762, 0.5
  %v1787 = vmul.f32 %v1767, 0.5
  %v1788 = vmul.f32 %v1770, 0.5
  %v1789 = vtanh.pop %v1773
  %v1790 = vtanh.pop %v1774
  %v1791 = vtanh.pop %v1775
  %v1792 = vtanh.pop %v1776
  %v1793 = vtanh.pop %v1777
  %v1794 = vtanh.pop %v1778
  %v1795 = vtanh.pop %v1779
  %v1796 = vtanh.pop %v1780
  %v1797 = vtanh.pop %v1781
  %v1798 = vtanh.pop %v1782
  %v1799 = vtanh.pop %v1783
  %v1800 = vtanh.pop %v1784
  %v1801 = vtanh.pop %v1785
  %v1802 = vtanh.pop %v1786
  %v1803 = vtanh.pop %v1787
  %v1804 = vtanh.pop %v1788
  %v1805 = vadd.f32 %v1789, 1.0
  %v1806 = vadd.f32 %v1790, 1.0
  %v1807 = vadd.f32 %v1791, 1.0
  %v1808 = vadd.f32 %v1792, 1.0
  %v1809 = vadd.f32 %v1793, 1.0
  %v1810 = vadd.f32 %v1794, 1.0
  %v1811 = vadd.f32 %v1795, 1.0
  %v1812 = vadd.f32 %v1796, 1.0
  %v1813 = vadd.f32 %v1797, 1.0
  %v1814 = vadd.f32 %v1798, 1.0
  %v1815 = vadd.f32 %v1799, 1.0
  %v1816 = vadd.f32 %v1800, 1.0
  %v1817 = vadd.f32 %v1801, 1.0
  %v1818 = vadd.f32 %v1802, 1.0
  %v1819 = vadd.f32 %v1803, 1.0
  %v1820 = vadd.f32 %v1804, 1.0
  %v1821 = vmul.f32 %v1805, 0.5
  %v1822 = vmul.f32 %v1806, 0.5
  %v1823 = vmul.f32 %v1807, 0.5
  %v1824 = vmul.f32 %v1808, 0.5
  %v1825 = vmul.f32 %v1809, 0.5
  %v1826 = vmul.f32 %v1810, 0.5
  %v1827 = vmul.f32 %v1811, 0.5
  %v1828 = vmul.f32 %v1812, 0.5
  %v1829 = vmul.f32 %v1813, 0.5
  %v1830 = vmul.f32 %v1814, 0.5
  %v1831 = vmul.f32 %v1815, 0.5
  %v1832 = vmul.f32 %v1816, 0.5
  %v1833 = vmul.f32 %v1817, 0.5
  %v1834 = vmul.f32 %v1818, 0.5
  %v1835 = vmul.f32 %v1819, 0.5
  %v1836 = vmul.f32 %v1820, 0.5
  %v1837 = vlaneseq
  %v1838 = vshrl.u32 %v1837, 7
  %v1839 = vsub.s32 1, %v1838
  %v1840 = vrot.slane %v36, %v1839
  %v1841 = vmul.f32 %v1821, %v1840
  %v1842 = vmul.f32 %v1822, %v1840
  %v1843 = vmul.f32 %v1823, %v1840
  %v1844 = vmul.f32 %v1824, %v1840
  %v1845 = vmul.f32 %v1825, %v1840
  %v1846 = vmul.f32 %v1826, %v1840
  %v1847 = vmul.f32 %v1827, %v1840
  %v1848 = vmul.f32 %v1828, %v1840
  %v1849 = vmul.f32 %v1829, %v1840
  %v1850 = vmul.f32 %v1830, %v1840
  %v1851 = vmul.f32 %v1831, %v1840
  %v1852 = vmul.f32 %v1832, %v1840
  %v1853 = vmul.f32 %v1833, %v1840
  %v1854 = vmul.f32 %v1834, %v1840
  %v1855 = vmul.f32 %v1835, %v1840
  %v1856 = vmul.f32 %v1836, %v1840
  %v1857 = vsel %vm1215, %v1841, 0.0
  %1858 = vadd.xlane.f32.xlu0 %v1857
  %v1859 = vpop.xlane.xlu0 %1858
  %v1860 = vsel %vm1215, %v1842, 0.0
  %1861 = vadd.xlane.f32.xlu0 %v1860
  %v1862 = vpop.xlane.xlu0 %1861
  %v1863 = vsel %vm1215, %v1843, 0.0
  %1864 = vadd.xlane.f32.xlu0 %v1863
  %v1865 = vpop.xlane.xlu0 %1864
  %v1866 = vsel %vm1215, %v1844, 0.0
  %1867 = vadd.xlane.f32.xlu0 %v1866
  %v1868 = vpop.xlane.xlu0 %1867
  %v1869 = vsel %vm1215, %v1845, 0.0
  %1870 = vadd.xlane.f32.xlu0 %v1869
  %v1871 = vpop.xlane.xlu0 %1870
  %v1872 = vsel %vm1215, %v1846, 0.0
  %1873 = vadd.xlane.f32.xlu0 %v1872
  %v1874 = vpop.xlane.xlu0 %1873
  %v1875 = vsel %vm1215, %v1847, 0.0
  %1876 = vadd.xlane.f32.xlu0 %v1875
  %v1877 = vpop.xlane.xlu0 %1876
  %v1878 = vsel %vm1215, %v1848, 0.0
  %1879 = vadd.xlane.f32.xlu0 %v1878
  %v1880 = vpop.xlane.xlu0 %1879
  %v1881 = vsel %vm1215, %v1849, 0.0
  %1882 = vadd.xlane.f32.xlu0 %v1881
  %v1883 = vpop.xlane.xlu0 %1882
  %v1884 = vsel %vm1215, %v1850, 0.0
  %1885 = vadd.xlane.f32.xlu0 %v1884
  %v1886 = vpop.xlane.xlu0 %1885
  %v1887 = vsel %vm1215, %v1851, 0.0
  %1888 = vadd.xlane.f32.xlu0 %v1887
  %v1889 = vpop.xlane.xlu0 %1888
  %v1890 = vsel %vm1215, %v1852, 0.0
  %1891 = vadd.xlane.f32.xlu0 %v1890
  %v1892 = vpop.xlane.xlu0 %1891
  %v1893 = vsel %vm1215, %v1853, 0.0
  %1894 = vadd.xlane.f32.xlu0 %v1893
  %v1895 = vpop.xlane.xlu0 %1894
  %v1896 = vsel %vm1215, %v1854, 0.0
  %1897 = vadd.xlane.f32.xlu0 %v1896
  %v1898 = vpop.xlane.xlu0 %1897
  %v1899 = vsel %vm1215, %v1855, 0.0
  %1900 = vadd.xlane.f32.xlu0 %v1899
  %v1901 = vpop.xlane.xlu0 %1900
  %v1902 = vsel %vm1215, %v1856, 0.0
  %1903 = vadd.xlane.f32.xlu0 %v1902
  %v1904 = vpop.xlane.xlu0 %1903
  %v1905 = vlaneseq
  %v1906 = vshrl.u32 %v1905, 7
  %v1907 = vsub.s32 7, %v1906
  %v1908 = vrot.slane %v34, %v1907
  %v1909 = vadd.f32 %v1859, %v1908
  %v1910 = vadd.f32 %v1862, %v1908
  %v1911 = vadd.f32 %v1865, %v1908
  %v1912 = vadd.f32 %v1868, %v1908
  %v1913 = vadd.f32 %v1871, %v1908
  %v1914 = vadd.f32 %v1874, %v1908
  %v1915 = vadd.f32 %v1877, %v1908
  %v1916 = vadd.f32 %v1880, %v1908
  %v1917 = vadd.f32 %v1883, %v1908
  %v1918 = vadd.f32 %v1886, %v1908
  %v1919 = vadd.f32 %v1889, %v1908
  %v1920 = vadd.f32 %v1892, %v1908
  %v1921 = vadd.f32 %v1895, %v1908
  %v1922 = vadd.f32 %v1898, %v1908
  %v1923 = vadd.f32 %v1901, %v1908
  %v1924 = vadd.f32 %v1904, %v1908
  %v1925 = vmul.f32 %v1909, 0.5
  %v1926 = vmul.f32 %v1910, 0.5
  %v1927 = vmul.f32 %v1911, 0.5
  %v1928 = vmul.f32 %v1912, 0.5
  %v1929 = vmul.f32 %v1913, 0.5
  %v1930 = vmul.f32 %v1914, 0.5
  %v1931 = vmul.f32 %v1915, 0.5
  %v1932 = vmul.f32 %v1916, 0.5
  %v1933 = vmul.f32 %v1917, 0.5
  %v1934 = vmul.f32 %v1918, 0.5
  %v1935 = vmul.f32 %v1919, 0.5
  %v1936 = vmul.f32 %v1920, 0.5
  %v1937 = vmul.f32 %v1921, 0.5
  %v1938 = vmul.f32 %v1922, 0.5
  %v1939 = vmul.f32 %v1923, 0.5
  %v1940 = vmul.f32 %v1924, 0.5
  %v1941 = vtanh.pop %v1925
  %v1942 = vtanh.pop %v1926
  %v1943 = vtanh.pop %v1927
  %v1944 = vtanh.pop %v1928
  %v1945 = vtanh.pop %v1929
  %v1946 = vtanh.pop %v1930
  %v1947 = vtanh.pop %v1931
  %v1948 = vtanh.pop %v1932
  %v1949 = vtanh.pop %v1933
  %v1950 = vtanh.pop %v1934
  %v1951 = vtanh.pop %v1935
  %v1952 = vtanh.pop %v1936
  %v1953 = vtanh.pop %v1937
  %v1954 = vtanh.pop %v1938
  %v1955 = vtanh.pop %v1939
  %v1956 = vtanh.pop %v1940
  %v1957 = vadd.f32 %v1941, 1.0
  %v1958 = vadd.f32 %v1942, 1.0
  %v1959 = vadd.f32 %v1943, 1.0
  %v1960 = vadd.f32 %v1944, 1.0
  %v1961 = vadd.f32 %v1945, 1.0
  %v1962 = vadd.f32 %v1946, 1.0
  %v1963 = vadd.f32 %v1947, 1.0
  %v1964 = vadd.f32 %v1948, 1.0
  %v1965 = vadd.f32 %v1949, 1.0
  %v1966 = vadd.f32 %v1950, 1.0
  %v1967 = vadd.f32 %v1951, 1.0
  %v1968 = vadd.f32 %v1952, 1.0
  %v1969 = vadd.f32 %v1953, 1.0
  %v1970 = vadd.f32 %v1954, 1.0
  %v1971 = vadd.f32 %v1955, 1.0
  %v1972 = vadd.f32 %v1956, 1.0
  %v1973 = vmul.f32 %v1957, 0.5
  %v1974 = vmul.f32 %v1958, 0.5
  %v1975 = vmul.f32 %v1959, 0.5
  %v1976 = vmul.f32 %v1960, 0.5
  %v1977 = vmul.f32 %v1961, 0.5
  %v1978 = vmul.f32 %v1962, 0.5
  %v1979 = vmul.f32 %v1963, 0.5
  %v1980 = vmul.f32 %v1964, 0.5
  %v1981 = vmul.f32 %v1965, 0.5
  %v1982 = vmul.f32 %v1966, 0.5
  %v1983 = vmul.f32 %v1967, 0.5
  %v1984 = vmul.f32 %v1968, 0.5
  %v1985 = vmul.f32 %v1969, 0.5
  %v1986 = vmul.f32 %v1970, 0.5
  %v1987 = vmul.f32 %v1971, 0.5
  %v1988 = vmul.f32 %v1972, 0.5
  %1989 = vrot.lane.b32.xlu0 %v18, 121
  %v1990 = vpop.permute.xlu0 %1989
  %1991 = vrot.lane.b32.xlu0 %v19, 121
  %v1992 = vpop.permute.xlu0 %1991
  %1993 = vrot.lane.b32.xlu0 %v20, 121
  %v1994 = vpop.permute.xlu0 %1993
  %1995 = vrot.lane.b32.xlu0 %v21, 121
  %v1996 = vpop.permute.xlu0 %1995
  %1997 = vrot.lane.b32.xlu0 %v22, 121
  %v1998 = vpop.permute.xlu0 %1997
  %1999 = vrot.lane.b32.xlu0 %v23, 121
  %v2000 = vpop.permute.xlu0 %1999
  %2001 = vrot.lane.b32.xlu0 %v24, 121
  %v2002 = vpop.permute.xlu0 %2001
  %2003 = vrot.lane.b32.xlu0 %v25, 121
  %v2004 = vpop.permute.xlu0 %2003
  %2005 = vrot.lane.b32.xlu0 %v26, 121
  %v2006 = vpop.permute.xlu0 %2005
  %2007 = vrot.lane.b32.xlu0 %v27, 121
  %v2008 = vpop.permute.xlu0 %2007
  %2009 = vrot.lane.b32.xlu0 %v28, 121
  %v2010 = vpop.permute.xlu0 %2009
  %2011 = vrot.lane.b32.xlu0 %v29, 121
  %v2012 = vpop.permute.xlu0 %2011
  %2013 = vrot.lane.b32.xlu0 %v30, 121
  %v2014 = vpop.permute.xlu0 %2013
  %2015 = vrot.lane.b32.xlu0 %v31, 121
  %v2016 = vpop.permute.xlu0 %2015
  %2017 = vrot.lane.b32.xlu0 %v32, 121
  %v2018 = vpop.permute.xlu0 %2017
  %2019 = vrot.lane.b32.xlu0 %v33, 121
  %v2020 = vpop.permute.xlu0 %2019
  %v2037 = vmul.f32 %v1973, %v1990
  %v2038 = vmul.f32 %v1974, %v1992
  %v2039 = vmul.f32 %v1975, %v1994
  %v2040 = vmul.f32 %v1976, %v1996
  %v2041 = vmul.f32 %v1977, %v1998
  %v2042 = vmul.f32 %v1978, %v2000
  %v2043 = vmul.f32 %v1979, %v2002
  %v2044 = vmul.f32 %v1980, %v2004
  %v2045 = vmul.f32 %v1981, %v2006
  %v2046 = vmul.f32 %v1982, %v2008
  %v2047 = vmul.f32 %v1983, %v2010
  %v2048 = vmul.f32 %v1984, %v2012
  %v2049 = vmul.f32 %v1985, %v2014
  %v2050 = vmul.f32 %v1986, %v2016
  %v2051 = vmul.f32 %v1987, %v2018
  %v2052 = vmul.f32 %v1988, %v2020
  %v2053 = vlaneseq
  %v2054 = vand.u32 %v2053, 127
  %2056 = vset.pattern.permute.xlu0 0
  %2057 = vperm.xlu0 %2056, %v2037
  %v2058 = vpop.permute.xlu0 %2057
  %2061 = vset.pattern.permute.xlu0 0
  %2062 = vperm.xlu0 %2061, %v2038
  %v2063 = vpop.permute.xlu0 %2062
  %2066 = vset.pattern.permute.xlu0 0
  %2067 = vperm.xlu0 %2066, %v2039
  %v2068 = vpop.permute.xlu0 %2067
  %2071 = vset.pattern.permute.xlu0 0
  %2072 = vperm.xlu0 %2071, %v2040
  %v2073 = vpop.permute.xlu0 %2072
  %2076 = vset.pattern.permute.xlu0 0
  %2077 = vperm.xlu0 %2076, %v2041
  %v2078 = vpop.permute.xlu0 %2077
  %2081 = vset.pattern.permute.xlu0 0
  %2082 = vperm.xlu0 %2081, %v2042
  %v2083 = vpop.permute.xlu0 %2082
  %2086 = vset.pattern.permute.xlu0 0
  %2087 = vperm.xlu0 %2086, %v2043
  %v2088 = vpop.permute.xlu0 %2087
  %2091 = vset.pattern.permute.xlu0 0
  %2092 = vperm.xlu0 %2091, %v2044
  %v2093 = vpop.permute.xlu0 %2092
  %2096 = vset.pattern.permute.xlu0 0
  %2097 = vperm.xlu0 %2096, %v2045
  %v2098 = vpop.permute.xlu0 %2097
  %2101 = vset.pattern.permute.xlu0 0
  %2102 = vperm.xlu0 %2101, %v2046
  %v2103 = vpop.permute.xlu0 %2102
  %2106 = vset.pattern.permute.xlu0 0
  %2107 = vperm.xlu0 %2106, %v2047
  %v2108 = vpop.permute.xlu0 %2107
  %2111 = vset.pattern.permute.xlu0 0
  %2112 = vperm.xlu0 %2111, %v2048
  %v2113 = vpop.permute.xlu0 %2112
  %2116 = vset.pattern.permute.xlu0 0
  %2117 = vperm.xlu0 %2116, %v2049
  %v2118 = vpop.permute.xlu0 %2117
  %2121 = vset.pattern.permute.xlu0 0
  %2122 = vperm.xlu0 %2121, %v2050
  %v2123 = vpop.permute.xlu0 %2122
  %2126 = vset.pattern.permute.xlu0 0
  %2127 = vperm.xlu0 %2126, %v2051
  %v2128 = vpop.permute.xlu0 %2127
  %2131 = vset.pattern.permute.xlu0 0
  %2132 = vperm.xlu0 %2131, %v2052
  %v2133 = vpop.permute.xlu0 %2132
  %vm2135 = vcmp.lt.s32.totalorder %v2054, 4
  %vm2136 = vcmp.eq.s32.totalorder %v2054, 4
  %v2137 = vsel %vm2136, %v1287, %v2058
  %v2138 = vsel %vm2136, %v1292, %v2063
  %v2139 = vsel %vm2136, %v1297, %v2068
  %v2140 = vsel %vm2136, %v1302, %v2073
  %v2141 = vsel %vm2136, %v1307, %v2078
  %v2142 = vsel %vm2136, %v1312, %v2083
  %v2143 = vsel %vm2136, %v1317, %v2088
  %v2144 = vsel %vm2136, %v1322, %v2093
  %v2145 = vsel %vm2136, %v1327, %v2098
  %v2146 = vsel %vm2136, %v1332, %v2103
  %v2147 = vsel %vm2136, %v1337, %v2108
  %v2148 = vsel %vm2136, %v1342, %v2113
  %v2149 = vsel %vm2136, %v1347, %v2118
  %v2150 = vsel %vm2136, %v1352, %v2123
  %v2151 = vsel %vm2136, %v1357, %v2128
  %v2152 = vsel %vm2136, %v1362, %v2133
  %v2153 = vsel %vm2135, %v18, %v2137
  %v2154 = vsel %vm2135, %v19, %v2138
  %v2155 = vsel %vm2135, %v20, %v2139
  %v2156 = vsel %vm2135, %v21, %v2140
  %v2157 = vsel %vm2135, %v22, %v2141
  %v2158 = vsel %vm2135, %v23, %v2142
  %v2159 = vsel %vm2135, %v24, %v2143
  %v2160 = vsel %vm2135, %v25, %v2144
  %v2161 = vsel %vm2135, %v26, %v2145
  %v2162 = vsel %vm2135, %v27, %v2146
  %v2163 = vsel %vm2135, %v28, %v2147
  %v2164 = vsel %vm2135, %v29, %v2148
  %v2165 = vsel %vm2135, %v30, %v2149
  %v2166 = vsel %vm2135, %v31, %v2150
  %v2167 = vsel %vm2135, %v32, %v2151
  %v2168 = vsel %vm2135, %v33, %v2152
  %2169 = vst.msk [vmem:[%s4] sm:$0xff] %vm59, %v2153
  %2170 = vst.msk [vmem:[%s4 + $0x8] sm:$0xff] %vm59, %v2154
  %2171 = vst.msk [vmem:[%s4 + $0x10] sm:$0xff] %vm59, %v2155
  %2172 = vst.msk [vmem:[%s4 + $0x18] sm:$0xff] %vm59, %v2156
  %2173 = vst.msk [vmem:[%s4 + $0x20] sm:$0xff] %vm59, %v2157
  %2174 = vst.msk [vmem:[%s4 + $0x28] sm:$0xff] %vm59, %v2158
  %2175 = vst.msk [vmem:[%s4 + $0x30] sm:$0xff] %vm59, %v2159
  %2176 = vst.msk [vmem:[%s4 + $0x38] sm:$0xff] %vm59, %v2160
  %2177 = vst.msk [vmem:[%s4 + $0x40] sm:$0xff] %vm59, %v2161
  %2178 = vst.msk [vmem:[%s4 + $0x48] sm:$0xff] %vm59, %v2162
  %2179 = vst.msk [vmem:[%s4 + $0x50] sm:$0xff] %vm59, %v2163
  %2180 = vst.msk [vmem:[%s4 + $0x58] sm:$0xff] %vm59, %v2164
  %2181 = vst.msk [vmem:[%s4 + $0x60] sm:$0xff] %vm59, %v2165
  %2182 = vst.msk [vmem:[%s4 + $0x68] sm:$0xff] %vm59, %v2166
  %2183 = vst.msk [vmem:[%s4 + $0x70] sm:$0xff] %vm59, %v2167
  %2184 = vst.msk [vmem:[%s4 + $0x78] sm:$0xff] %vm59, %v2168
  // Predicated region
  $region18: #{garch_pfrnn_forward.1} parent=0 // pred_check
    _
  $region19: #{garch_pfrnn_forward.1} parent=0 // pred_check_branch
    %2186 = sbr.rel (0) target = $region21
  $region20: #{garch_pfrnn_forward.1} parent=0 // pred_region
    _
  $region21: #{garch_pfrnn_forward.1} parent=0 // pred_fallthru
    _
  // Predicated region
  $region22: #{garch_pfrnn_forward.1} parent=0 // pred_check
    _
  $region23: #{garch_pfrnn_forward.1} parent=0 // pred_check_branch
    %2188 = sbr.rel (0) target = $region25
  $region24: #{garch_pfrnn_forward.1} parent=0 // pred_region
    _
  $region25: #{garch_pfrnn_forward.1} parent=0 // pred_fallthru
    _

</llo_original>
